<compile_context>
chip_gen: v7x
topology: tpu7x:2x2x1
jax: 0.10.0
libtpu: 0.0.40
codegen_flags: <defaults>
</compile_context>

<pallas_src>
import math

import numpy as np
import jax
import jax.numpy as jnp
from jax.experimental import pallas as pl
from jax.experimental.pallas import tpu as pltpu

SQRT_2 = math.sqrt(2.0)
INV_SQRT_2 = 1.0 / SQRT_2
LOG_2_OVER_PI = math.log(2.0 / math.pi)
MIN_ERFC_INV = 1e-6


def _round_up(n, m):
    return -(-n // m) * m


def _cdiv(a, b):
    return -(-a // b)


def _exact_recip(v):
    return 1.0 / v


# ---------------------------------------------------------------------------
# Elementwise math helpers (pure jnp -> shared by the Pallas kernel and the
# pure-JAX reference).
# ---------------------------------------------------------------------------
def _log_erfc_pos(x, recip):
    """log(erfc(x)) for x >= 0 (Numerical Recipes rational approx, log-space)."""
    t = recip(1.0 + 0.5 * x)
    poly = -1.26551223 + t * (1.00002368 + t * (0.37409196 + t * (0.09678418 +
           t * (-0.18628806 + t * (0.27886807 + t * (-1.13520398 + t * (1.48851587 +
           t * (-0.82215223 + t * 0.17087277))))))))
    return jnp.log(t) + (poly - x * x)


def _erfinv(x):
    """float32 erfinv (Giles' polynomial), |x| < 1."""
    w = -jnp.log((1.0 - x) * (1.0 + x))
    ws = w - 2.5
    p1 = 2.81022636e-08
    for c in (3.43273939e-07, -3.5233877e-06, -4.39150654e-06, 0.00021858087,
              -0.00125372503, -0.00417768164, 0.246640727, 1.50140941):
        p1 = c + p1 * ws
    wl = jnp.sqrt(w) - 3.0
    p2 = -0.000200214257
    for c in (0.000100950558, 0.00134934322, -0.00367342844, 0.00573950773,
              -0.0076224613, 0.00943887047, 1.00167406, 2.83297682):
        p2 = c + p2 * wl
    return jnp.where(w < 5.0, p1, p2) * x


def _extreme_activation(p, ap, recip):
    """ExtremeActivation.forward.

    p : (bm, Dp) f32 pre-activation.
    ap: (8, Dp) packed params — rows:
        0..2 = softmax mix; 3 = heavy; 4 = 1/heavy;
        5 = light; 6 = -1/light; 7 = 2/light.
    Accumulates as it goes to keep few (bm, Dp) temporaries live.
    """
    mix0, mix1, mix2 = ap[0:1, :], ap[1:2, :], ap[2:3, :]
    heavy, inv_heavy = ap[3:4, :], ap[4:5, :]
    light, neg_inv_light, two_inv_light = ap[5:6, :], ap[6:7, :], ap[7:8, :]

    absz = jnp.abs(p)
    sgn = jnp.where(p >= 0, 1.0, -1.0)          # p==0 gives 0 in both tails anyway
    acc = mix0 * p

    # heavy-tail branch: _extreme_transform_and_lad(|z|, heavy)[0] * sign(z)
    log_g_h = _log_erfc_pos(absz * INV_SQRT_2, recip)      # log erfc(|z|/sqrt(2))
    z_heavy = (jnp.exp(-heavy * log_g_h) - 1.0) * inv_heavy
    acc = acc + mix1 * (z_heavy * sgn)

    # light-tail branch: _extreme_inverse_and_lad(|z|, light)[0] * sign(z)
    log_inner = jnp.log(1.0 + light * absz)
    g_l = jnp.exp(neg_inv_light * log_inner)               # inner ** (-1/light)
    erfcinv_stable = _erfinv(1.0 - jnp.maximum(g_l, MIN_ERFC_INV))
    base = jnp.maximum(LOG_2_OVER_PI + two_inv_light * log_inner, 1e-30)
    erfcinv_small = jnp.sqrt(base - jnp.log(base)) * INV_SQRT_2
    z_light = SQRT_2 * jnp.where(g_l > MIN_ERFC_INV, erfcinv_stable, erfcinv_small)
    acc = acc + mix2 * (z_light * sgn)
    return acc


# ---------------------------------------------------------------------------
# Pallas kernel: fused MADE forward + ExtremeActivation
# ---------------------------------------------------------------------------
def extreme_network_kernel(x_ref, w0_ref, b0_ref, wblk_ref, bblk_ref,
                           wf_ref, bf_ref, ap_ref, out_ref):
    nb = wblk_ref.shape[0]

    # initial masked linear: F -> Hp (bf16 MXU inputs, f32 accumulation)
    x = x_ref[...].astype(jnp.bfloat16)                   # (bm, F)
    h = jnp.dot(x, w0_ref[...], preferred_element_type=jnp.float32) + b0_ref[...]

    for b in range(nb):                                   # MaskedResidualBlocks (unrolled)
        t = jnp.maximum(h, 0.0).astype(jnp.bfloat16)
        t = jnp.dot(t, wblk_ref[b, 0],                    # ref-sliced per-block weight
                    preferred_element_type=jnp.float32) + bblk_ref[b, 0]
        t = jnp.maximum(t, 0.0).astype(jnp.bfloat16)
        t = jnp.dot(t, wblk_ref[b, 1],
                    preferred_element_type=jnp.float32) + bblk_ref[b, 1]
        h = h + t

    # final masked linear: Hp -> Dp (lane-dense, Dp % 128 == 0)
    p = jnp.dot(h.astype(jnp.bfloat16), wf_ref[...],
                preferred_element_type=jnp.float32) + bf_ref[...]

    # ExtremeActivation in f32 (EUP-bound; approx reciprocal for erfc's divide)
    out_ref[...] = _extreme_activation(
        p, ap_ref[...], recip=lambda v: pl.reciprocal(v, approx=True)
    ).astype(out_ref.dtype)


# ---------------------------------------------------------------------------
# Wrapper: generation-aware batch tiling + VMEM budgeting
# ---------------------------------------------------------------------------
def _cores_per_chip():
    """2 TensorCores per device on v4/v5p (megacore) and v7x; 1 on v5e/v6e."""
    try:
        kind = jax.devices()[0].device_kind.lower()
    except Exception:
        return 1
    return 2 if any(tag in kind for tag in ("v4", "v5p", "v7", "7x")) else 1


def _choose_bm(B, n_tc):
    """Single grid step on 1-TC chips (grid is a serial loop: steps are pure
    overhead); >= 1 step per TensorCore on multi-TC chips; bm capped at 512."""
    per_core = _cdiv(B, max(1, n_tc))
    bm = _round_up(per_core, 8)
    if bm >= 16:
        bm = _round_up(bm, 16)     # keep bf16 activation casts sublane-aligned
    return int(max(8, min(512, bm)))


def _vmem_bytes_estimate(bm, F, Hp, Dp, nb, out_bytes, weight_bufs):
    weights = 2 * weight_bufs * (F * Hp + nb * 2 * Hp * Hp + Hp * Dp)   # bf16
    biases = 4 * weight_bufs * (Hp + nb * 2 * Hp + Dp + 8 * Dp)         # f32
    io = 2 * (bm * F * 4 + bm * Dp * out_bytes)                         # double-buffered x/out
    temps = 12 * bm * max(Hp, Dp) * 4                                   # live f32 temporaries
    return weights + biases + io + temps


def extreme_network_forward(x, params, *, d_out=None, bm=None,
                            out_dtype=jnp.float32):
    w0t, b0, wblk, bblk, wft, bf, act_params = params
    B, F = x.shape
    Hp = w0t.shape[1]
    Dp = wft.shape[1]
    nb = wblk.shape[0]
    if d_out is None:
        d_out = Dp
    n_tc = _cores_per_chip()
    if bm is None:
        bm = _choose_bm(B, n_tc)

    # pad batch to a tile multiple instead of dropping the remainder
    Bp = bm * _cdiv(B, bm)
    xp = x if Bp == B else jnp.pad(x, ((0, Bp - B), (0, 0)))
    grid = (Bp // bm,)
    out_bytes = jnp.dtype(out_dtype).itemsize

    def call(single_buffer_weights):
        def const_spec(shape, index_map):
            # index_map never changes -> no re-DMA; single-buffer to halve the
            # resident weight VMEM (matters on v7x's 64 MiB once the stack grows).
            if single_buffer_weights:
                return pl.BlockSpec(shape, index_map,
                                    pipeline_mode=pl.Buffered(1))
            return pl.BlockSpec(shape, index_map)

        in_specs = [
            pl.BlockSpec((bm, F), lambda i: (i, 0)),                 # x (batch-tiled)
            const_spec(w0t.shape, lambda i: (0, 0)),                 # W0^T (bf16)
            const_spec(b0.shape, lambda i: (0, 0)),                  # b0
            const_spec(wblk.shape, lambda i: (0, 0, 0, 0)),          # block weights (bf16)
            const_spec(bblk.shape, lambda i: (0, 0, 0, 0)),          # block biases
            const_spec(wft.shape, lambda i: (0, 0)),                 # Wf^T (bf16)
            const_spec(bf.shape, lambda i: (0, 0)),                  # bf
            const_spec(act_params.shape, lambda i: (0, 0)),          # packed tail/mix params
        ]
        out_specs = pl.BlockSpec((bm, Dp), lambda i: (i, 0))         # lane-dense store

        est = _vmem_bytes_estimate(bm, F, Hp, Dp, nb, out_bytes,
                                   1 if single_buffer_weights else 2)
        vmem_limit = None
        if est > (32 << 20):        # above the default scoped limit -> be explicit
            vmem_limit = int(min(est + (4 << 20), 100 << 20))

        return pl.pallas_call(
            extreme_network_kernel,
            out_shape=jax.ShapeDtypeStruct((Bp, Dp), out_dtype),
            grid_spec=pltpu.PrefetchScalarGridSpec(
                num_scalar_prefetch=0,
                grid=grid,
                in_specs=in_specs,
                out_specs=out_specs,
            ),
            compiler_params=pltpu.CompilerParams(
                dimension_semantics=("parallel",),
                vmem_limit_bytes=vmem_limit,
            ),
        )(xp, w0t, b0, wblk, bblk, wft, bf, act_params)

    try:
        out = jax.block_until_ready(call(True))
    except Exception:
        # fallback: JAX build without single-buffer pipeline_mode support
        out = jax.block_until_ready(call(False))

    return out[:B, :d_out]


# ---------------------------------------------------------------------------
# Deterministic parameter construction (masks exactly as nflows MADE builds them),
# zero-padded to 128-lane-multiple hidden/output widths, bf16 weights for the MXU,
# and a packed (8, Dp) ExtremeActivation parameter block with hoisted reciprocals.
# ---------------------------------------------------------------------------
def make_params(key, features, hidden_features, num_blocks, output_multiplier):
    F, H, nb, M = features, hidden_features, num_blocks, output_multiplier
    D = F * M
    Hp = _round_up(H, 128)
    Dp = _round_up(D, 128)

    # --- autoregressive degrees / masks (nflows, non-random, residual blocks) ---
    in_deg = np.arange(1, F + 1)                            # input degrees
    hid_deg = np.arange(H) % max(1, F - 1) + min(1, F - 1)  # hidden degrees
    mask0 = (hid_deg[:, None] >= in_deg[None, :]).astype(np.float32)     # (H, F)
    mask_hh = (hid_deg[:, None] >= hid_deg[None, :]).astype(np.float32)  # (H, H)
    out_deg = np.repeat(np.arange(1, F + 1), M)             # tile(degrees, M)
    maskf = (out_deg[:, None] > hid_deg[None, :]).astype(np.float32)     # (D, H)

    ks = jax.random.split(key, 4 + nb)

    w0 = 0.3 * jax.random.normal(ks[0], (H, F), jnp.float32)
    b0 = 0.1 * jax.random.normal(ks[1], (H,), jnp.float32)
    wf = 0.3 * jax.random.normal(ks[2], (D, H), jnp.float32)
    bf = 0.1 * jax.random.normal(ks[3], (D,), jnp.float32)

    def pad2(a, rows, cols):
        return jnp.pad(a, ((0, rows - a.shape[0]), (0, cols - a.shape[1])))

    # pre-masked, pre-transposed, zero-padded weights
    w0t = pad2((w0 * jnp.asarray(mask0)).T, F, Hp).astype(jnp.bfloat16)   # (F, Hp)
    wft = pad2((wf * jnp.asarray(maskf)).T, Hp, Dp).astype(jnp.bfloat16)  # (Hp, Dp)
    b0p = pad2(b0.reshape(1, H), 1, Hp)                                   # (1, Hp) f32
    bfp = pad2(bf.reshape(1, D), 1, Dp)                                   # (1, Dp) f32

    wblk_list, bblk_list = [], []
    for b in range(nb):
        k0, k1, k2, k3 = jax.random.split(ks[4 + b], 4)
        wb0 = 0.3 * jax.random.normal(k0, (H, H), jnp.float32)
        bb0 = 0.1 * jax.random.normal(k1, (H,), jnp.float32)
        # nflows zero_initialization of the block's last layer: small values
        wb1 = 1e-3 * jax.random.normal(k2, (H, H), jnp.float32)
        bb1 = 1e-3 * jax.random.normal(k3, (H,), jnp.float32)
        w0p = pad2((wb0 * jnp.asarray(mask_hh)).T, Hp, Hp)
        w1p = pad2((wb1 * jnp.asarray(mask_hh)).T, Hp, Hp)
        wblk_list.append(jnp.stack([w0p, w1p]).astype(jnp.bfloat16))
        bblk_list.append(jnp.stack([pad2(bb0.reshape(1, H), 1, Hp),
                                    pad2(bb1.reshape(1, H), 1, Hp)]))

    wblk = jnp.stack(wblk_list)                             # (nb, 2, Hp, Hp) bf16
    bblk = jnp.stack(bblk_list)                             # (nb, 2, 1, Hp)  f32

    # --- ExtremeActivation parameters (module __init__ initializes with ones) ---
    # Packed (8, Dp): rows 0..2 softmax mix, 3 heavy, 4 1/heavy, 5 light,
    # 6 -1/light, 7 2/light (reciprocals hoisted out of the kernel).
    # Padded p columns are exactly 0 -> finite everywhere; padded param columns
    # carry the same init values and are sliced away in the wrapper.
    unc_mix = jnp.ones((Dp, 3), jnp.float32)
    unc_params = jnp.ones((Dp, 2), jnp.float32)
    heavy = jax.nn.sigmoid(unc_params[:, 0]) * 2.0          # (Dp,)
    light = jax.nn.sigmoid(unc_params[:, 1]) * 2.0          # (Dp,)
    mix = jax.nn.softmax(unc_mix, axis=1)                   # (Dp, 3)
    act_params = jnp.stack([mix[:, 0], mix[:, 1], mix[:, 2],
                            heavy, 1.0 / heavy,
                            light, -1.0 / light, 2.0 / light], axis=0)   # (8, Dp)

    return (w0t, b0p, wblk, bblk, wft, bfp, act_params)


# ---------------------------------------------------------------------------
# Pure-JAX reference (same math as the kernel, exact reciprocal, no Pallas)
# ---------------------------------------------------------------------------
def reference_forward(x, params, d_out):
    w0t, b0, wblk, bblk, wft, bf, ap = params
    h = jnp.dot(x.astype(jnp.bfloat16), w0t, preferred_element_type=jnp.float32) + b0
    for b in range(wblk.shape[0]):
        t = jnp.maximum(h, 0.0).astype(jnp.bfloat16)
        t = jnp.dot(t, wblk[b, 0], preferred_element_type=jnp.float32) + bblk[b, 0]
        t = jnp.maximum(t, 0.0).astype(jnp.bfloat16)
        t = jnp.dot(t, wblk[b, 1], preferred_element_type=jnp.float32) + bblk[b, 1]
        h = h + t
    p = jnp.dot(h.astype(jnp.bfloat16), wft, preferred_element_type=jnp.float32) + bf
    return _extreme_activation(p, ap, _exact_recip)[:, :d_out]


if __name__ == "__main__":
    # small shapes consistent with the module's forward
    features, hidden_features, num_blocks, output_multiplier = 8, 32, 2, 2
    batch = 16

    key = jax.random.PRNGKey(0)
    kx, kp = jax.random.split(key)
    x = jax.random.normal(kx, (batch, features), jnp.float32)
    params = make_params(kp, features, hidden_features, num_blocks,
                         output_multiplier)
    d_out = features * output_multiplier

    out = extreme_network_forward(x, params, d_out=d_out)
    out = jax.block_until_ready(out)

    assert out.shape == (batch, d_out), out.shape
    assert bool(jnp.all(jnp.isfinite(out)))

    ref = reference_forward(x, params, d_out)
    max_err = float(jnp.max(jnp.abs(out - ref)))
    assert bool(jnp.allclose(out, ref, rtol=1e-2, atol=1e-2)), max_err

    print("KERNEL_OK")
</pallas_src>

<mosaic_0001>
module attributes {stable_mosaic.version = 11 : i64} {
  func.func @extreme_network_kernel(%arg0: i32, %arg1: memref<16x8xf32, #tpu.memory_space<vmem>>, %arg2: memref<8x128xbf16, #tpu.memory_space<vmem>>, %arg3: memref<1x128xf32, #tpu.memory_space<vmem>>, %arg4: memref<2x2x128x128xbf16, #tpu.memory_space<vmem>>, %arg5: memref<2x2x1x128xf32, #tpu.memory_space<vmem>>, %arg6: memref<128x128xbf16, #tpu.memory_space<vmem>>, %arg7: memref<1x128xf32, #tpu.memory_space<vmem>>, %arg8: memref<8x128xf32, #tpu.memory_space<vmem>>, %arg9: memref<16x128xf32, #tpu.memory_space<vmem>>) attributes {dimension_semantics = [#tpu.dimension_semantics<parallel>], iteration_bounds = array<i64: 1>, scalar_prefetch = 0 : i64, scratch_operands = 0 : i64, tpu.core_type = #tpu.core_type<tc>, window_params = [{transform_indices = @transform_0, window_bounds = array<i64: 16, 8>}, {pipeline_mode = #tpu.pipeline_mode<synchronous>, transform_indices = @transform_1, window_bounds = array<i64: 8, 128>}, {pipeline_mode = #tpu.pipeline_mode<synchronous>, transform_indices = @transform_2, window_bounds = array<i64: 1, 128>}, {pipeline_mode = #tpu.pipeline_mode<synchronous>, transform_indices = @transform_3, window_bounds = array<i64: 2, 2, 128, 128>}, {pipeline_mode = #tpu.pipeline_mode<synchronous>, transform_indices = @transform_4, window_bounds = array<i64: 2, 2, 1, 128>}, {pipeline_mode = #tpu.pipeline_mode<synchronous>, transform_indices = @transform_5, window_bounds = array<i64: 128, 128>}, {pipeline_mode = #tpu.pipeline_mode<synchronous>, transform_indices = @transform_6, window_bounds = array<i64: 1, 128>}, {pipeline_mode = #tpu.pipeline_mode<synchronous>, transform_indices = @transform_7, window_bounds = array<i64: 8, 128>}, {transform_indices = @transform_8, window_bounds = array<i64: 16, 128>}]} {
    %c0 = arith.constant 0 : index
    %c0_0 = arith.constant 0 : index
    %0 = vector.load %arg1[%c0, %c0_0] : memref<16x8xf32, #tpu.memory_space<vmem>>, vector<16x8xf32>
    %1 = arith.truncf %0 : vector<16x8xf32> to vector<16x8xbf16>
    %c0_1 = arith.constant 0 : index
    %c0_2 = arith.constant 0 : index
    %2 = vector.load %arg2[%c0_1, %c0_2] : memref<8x128xbf16, #tpu.memory_space<vmem>>, vector<8x128xbf16>
    %cst = arith.constant dense<0.000000e+00> : vector<16x128xf32>
    %3 = tpu.matmul %1, %2, %cst {dimension_numbers = #tpu.dot_dimension_numbers<[1], [0], [0], [1], [0, 0, 1, 1], [], []>} : vector<16x8xbf16>, vector<8x128xbf16>, vector<16x128xf32> -> vector<16x128xf32>
    %c0_3 = arith.constant 0 : index
    %c0_4 = arith.constant 0 : index
    %4 = vector.load %arg3[%c0_3, %c0_4] : memref<1x128xf32, #tpu.memory_space<vmem>>, vector<1x128xf32>
    %5 = vector.broadcast %4 : vector<1x128xf32> to vector<16x128xf32>
    %6 = arith.addf %3, %5 : vector<16x128xf32>
    %cst_5 = arith.constant 0.000000e+00 : f32
    %7 = vector.broadcast %cst_5 : f32 to vector<16x128xf32>
    %8 = arith.maximumf %6, %7 : vector<16x128xf32>
    %9 = arith.truncf %8 : vector<16x128xf32> to vector<16x128xbf16>
    %c0_6 = arith.constant 0 : index
    %c0_7 = arith.constant 0 : index
    %c0_8 = arith.constant 0 : index
    %c0_9 = arith.constant 0 : index
    %10 = vector.load %arg4[%c0_6, %c0_7, %c0_8, %c0_9] : memref<2x2x128x128xbf16, #tpu.memory_space<vmem>>, vector<1x1x128x128xbf16>
    %11 = vector.shape_cast %10 : vector<1x1x128x128xbf16> to vector<128x128xbf16>
    %cst_10 = arith.constant dense<0.000000e+00> : vector<16x128xf32>
    %12 = tpu.matmul %9, %11, %cst_10 {dimension_numbers = #tpu.dot_dimension_numbers<[1], [0], [0], [1], [0, 0, 1, 1], [], []>} : vector<16x128xbf16>, vector<128x128xbf16>, vector<16x128xf32> -> vector<16x128xf32>
    %c0_11 = arith.constant 0 : index
    %c0_12 = arith.constant 0 : index
    %c0_13 = arith.constant 0 : index
    %c0_14 = arith.constant 0 : index
    %13 = vector.load %arg5[%c0_11, %c0_12, %c0_13, %c0_14] : memref<2x2x1x128xf32, #tpu.memory_space<vmem>>, vector<1x1x1x128xf32>
    %14 = vector.shape_cast %13 : vector<1x1x1x128xf32> to vector<1x128xf32>
    %15 = vector.broadcast %14 : vector<1x128xf32> to vector<16x128xf32>
    %16 = arith.addf %12, %15 : vector<16x128xf32>
    %cst_15 = arith.constant 0.000000e+00 : f32
    %17 = vector.broadcast %cst_15 : f32 to vector<16x128xf32>
    %18 = arith.maximumf %16, %17 : vector<16x128xf32>
    %19 = arith.truncf %18 : vector<16x128xf32> to vector<16x128xbf16>
    %c0_16 = arith.constant 0 : index
    %c1 = arith.constant 1 : index
    %c0_17 = arith.constant 0 : index
    %c0_18 = arith.constant 0 : index
    %20 = vector.load %arg4[%c0_16, %c1, %c0_17, %c0_18] : memref<2x2x128x128xbf16, #tpu.memory_space<vmem>>, vector<1x1x128x128xbf16>
    %21 = vector.shape_cast %20 : vector<1x1x128x128xbf16> to vector<128x128xbf16>
    %cst_19 = arith.constant dense<0.000000e+00> : vector<16x128xf32>
    %22 = tpu.matmul %19, %21, %cst_19 {dimension_numbers = #tpu.dot_dimension_numbers<[1], [0], [0], [1], [0, 0, 1, 1], [], []>} : vector<16x128xbf16>, vector<128x128xbf16>, vector<16x128xf32> -> vector<16x128xf32>
    %c0_20 = arith.constant 0 : index
    %c1_21 = arith.constant 1 : index
    %c0_22 = arith.constant 0 : index
    %c0_23 = arith.constant 0 : index
    %23 = vector.load %arg5[%c0_20, %c1_21, %c0_22, %c0_23] : memref<2x2x1x128xf32, #tpu.memory_space<vmem>>, vector<1x1x1x128xf32>
    %24 = vector.shape_cast %23 : vector<1x1x1x128xf32> to vector<1x128xf32>
    %25 = vector.broadcast %24 : vector<1x128xf32> to vector<16x128xf32>
    %26 = arith.addf %22, %25 : vector<16x128xf32>
    %27 = arith.addf %6, %26 : vector<16x128xf32>
    %cst_24 = arith.constant 0.000000e+00 : f32
    %28 = vector.broadcast %cst_24 : f32 to vector<16x128xf32>
    %29 = arith.maximumf %27, %28 : vector<16x128xf32>
    %30 = arith.truncf %29 : vector<16x128xf32> to vector<16x128xbf16>
    %c1_25 = arith.constant 1 : index
    %c0_26 = arith.constant 0 : index
    %c0_27 = arith.constant 0 : index
    %c0_28 = arith.constant 0 : index
    %31 = vector.load %arg4[%c1_25, %c0_26, %c0_27, %c0_28] : memref<2x2x128x128xbf16, #tpu.memory_space<vmem>>, vector<1x1x128x128xbf16>
    %32 = vector.shape_cast %31 : vector<1x1x128x128xbf16> to vector<128x128xbf16>
    %cst_29 = arith.constant dense<0.000000e+00> : vector<16x128xf32>
    %33 = tpu.matmul %30, %32, %cst_29 {dimension_numbers = #tpu.dot_dimension_numbers<[1], [0], [0], [1], [0, 0, 1, 1], [], []>} : vector<16x128xbf16>, vector<128x128xbf16>, vector<16x128xf32> -> vector<16x128xf32>
    %c1_30 = arith.constant 1 : index
    %c0_31 = arith.constant 0 : index
    %c0_32 = arith.constant 0 : index
    %c0_33 = arith.constant 0 : index
    %34 = vector.load %arg5[%c1_30, %c0_31, %c0_32, %c0_33] : memref<2x2x1x128xf32, #tpu.memory_space<vmem>>, vector<1x1x1x128xf32>
    %35 = vector.shape_cast %34 : vector<1x1x1x128xf32> to vector<1x128xf32>
    %36 = vector.broadcast %35 : vector<1x128xf32> to vector<16x128xf32>
    %37 = arith.addf %33, %36 : vector<16x128xf32>
    %cst_34 = arith.constant 0.000000e+00 : f32
    %38 = vector.broadcast %cst_34 : f32 to vector<16x128xf32>
    %39 = arith.maximumf %37, %38 : vector<16x128xf32>
    %40 = arith.truncf %39 : vector<16x128xf32> to vector<16x128xbf16>
    %c1_35 = arith.constant 1 : index
    %c1_36 = arith.constant 1 : index
    %c0_37 = arith.constant 0 : index
    %c0_38 = arith.constant 0 : index
    %41 = vector.load %arg4[%c1_35, %c1_36, %c0_37, %c0_38] : memref<2x2x128x128xbf16, #tpu.memory_space<vmem>>, vector<1x1x128x128xbf16>
    %42 = vector.shape_cast %41 : vector<1x1x128x128xbf16> to vector<128x128xbf16>
    %cst_39 = arith.constant dense<0.000000e+00> : vector<16x128xf32>
    %43 = tpu.matmul %40, %42, %cst_39 {dimension_numbers = #tpu.dot_dimension_numbers<[1], [0], [0], [1], [0, 0, 1, 1], [], []>} : vector<16x128xbf16>, vector<128x128xbf16>, vector<16x128xf32> -> vector<16x128xf32>
    %c1_40 = arith.constant 1 : index
    %c1_41 = arith.constant 1 : index
    %c0_42 = arith.constant 0 : index
    %c0_43 = arith.constant 0 : index
    %44 = vector.load %arg5[%c1_40, %c1_41, %c0_42, %c0_43] : memref<2x2x1x128xf32, #tpu.memory_space<vmem>>, vector<1x1x1x128xf32>
    %45 = vector.shape_cast %44 : vector<1x1x1x128xf32> to vector<1x128xf32>
    %46 = vector.broadcast %45 : vector<1x128xf32> to vector<16x128xf32>
    %47 = arith.addf %43, %46 : vector<16x128xf32>
    %48 = arith.addf %27, %47 : vector<16x128xf32>
    %49 = arith.truncf %48 : vector<16x128xf32> to vector<16x128xbf16>
    %c0_44 = arith.constant 0 : index
    %c0_45 = arith.constant 0 : index
    %50 = vector.load %arg6[%c0_44, %c0_45] : memref<128x128xbf16, #tpu.memory_space<vmem>>, vector<128x128xbf16>
    %cst_46 = arith.constant dense<0.000000e+00> : vector<16x128xf32>
    %51 = tpu.matmul %49, %50, %cst_46 {dimension_numbers = #tpu.dot_dimension_numbers<[1], [0], [0], [1], [0, 0, 1, 1], [], []>} : vector<16x128xbf16>, vector<128x128xbf16>, vector<16x128xf32> -> vector<16x128xf32>
    %c0_47 = arith.constant 0 : index
    %c0_48 = arith.constant 0 : index
    %52 = vector.load %arg7[%c0_47, %c0_48] : memref<1x128xf32, #tpu.memory_space<vmem>>, vector<1x128xf32>
    %53 = vector.broadcast %52 : vector<1x128xf32> to vector<16x128xf32>
    %54 = arith.addf %51, %53 : vector<16x128xf32>
    %c0_49 = arith.constant 0 : index
    %c0_50 = arith.constant 0 : index
    %55 = vector.load %arg8[%c0_49, %c0_50] : memref<8x128xf32, #tpu.memory_space<vmem>>, vector<8x128xf32>
    %56 = vector.extract_strided_slice %55 {offsets = [0, 0], sizes = [1, 128], strides = [1, 1]} : vector<8x128xf32> to vector<1x128xf32>
    %57 = vector.extract_strided_slice %55 {offsets = [1, 0], sizes = [1, 128], strides = [1, 1]} : vector<8x128xf32> to vector<1x128xf32>
    %58 = vector.extract_strided_slice %55 {offsets = [2, 0], sizes = [1, 128], strides = [1, 1]} : vector<8x128xf32> to vector<1x128xf32>
    %59 = vector.extract_strided_slice %55 {offsets = [3, 0], sizes = [1, 128], strides = [1, 1]} : vector<8x128xf32> to vector<1x128xf32>
    %60 = vector.extract_strided_slice %55 {offsets = [4, 0], sizes = [1, 128], strides = [1, 1]} : vector<8x128xf32> to vector<1x128xf32>
    %61 = vector.extract_strided_slice %55 {offsets = [5, 0], sizes = [1, 128], strides = [1, 1]} : vector<8x128xf32> to vector<1x128xf32>
    %62 = vector.extract_strided_slice %55 {offsets = [6, 0], sizes = [1, 128], strides = [1, 1]} : vector<8x128xf32> to vector<1x128xf32>
    %63 = vector.extract_strided_slice %55 {offsets = [7, 0], sizes = [1, 128], strides = [1, 1]} : vector<8x128xf32> to vector<1x128xf32>
    %64 = math.absf %54 : vector<16x128xf32>
    %cst_51 = arith.constant 0.000000e+00 : f32
    %65 = vector.broadcast %cst_51 : f32 to vector<16x128xf32>
    %66 = arith.cmpf oge, %54, %65 : vector<16x128xf32>
    %cst_52 = arith.constant 1.000000e+00 : f32
    %cst_53 = arith.constant -1.000000e+00 : f32
    %67 = vector.broadcast %cst_52 : f32 to vector<16x128xf32>
    %68 = vector.broadcast %cst_53 : f32 to vector<16x128xf32>
    %69 = arith.select %66, %67, %68 : vector<16x128xi1>, vector<16x128xf32>
    %70 = vector.broadcast %56 : vector<1x128xf32> to vector<16x128xf32>
    %71 = arith.mulf %70, %54 : vector<16x128xf32>
    %cst_54 = arith.constant 0.707106769 : f32
    %72 = vector.broadcast %cst_54 : f32 to vector<16x128xf32>
    %73 = arith.mulf %64, %72 : vector<16x128xf32>
    %cst_55 = arith.constant 5.000000e-01 : f32
    %74 = vector.broadcast %cst_55 : f32 to vector<16x128xf32>
    %75 = arith.mulf %74, %73 : vector<16x128xf32>
    %cst_56 = arith.constant 1.000000e+00 : f32
    %76 = vector.broadcast %cst_56 : f32 to vector<16x128xf32>
    %77 = arith.addf %76, %75 : vector<16x128xf32>
    %78 = tpu.reciprocal %77 {approx = true} : vector<16x128xf32> -> vector<16x128xf32>
    %cst_57 = arith.constant 0.170872763 : f32
    %79 = vector.broadcast %cst_57 : f32 to vector<16x128xf32>
    %80 = arith.mulf %78, %79 : vector<16x128xf32>
    %cst_58 = arith.constant -0.822152256 : f32
    %81 = vector.broadcast %cst_58 : f32 to vector<16x128xf32>
    %82 = arith.addf %81, %80 : vector<16x128xf32>
    %83 = arith.mulf %78, %82 : vector<16x128xf32>
    %cst_59 = arith.constant 1.48851585 : f32
    %84 = vector.broadcast %cst_59 : f32 to vector<16x128xf32>
    %85 = arith.addf %84, %83 : vector<16x128xf32>
    %86 = arith.mulf %78, %85 : vector<16x128xf32>
    %cst_60 = arith.constant -1.13520396 : f32
    %87 = vector.broadcast %cst_60 : f32 to vector<16x128xf32>
    %88 = arith.addf %87, %86 : vector<16x128xf32>
    %89 = arith.mulf %78, %88 : vector<16x128xf32>
    %cst_61 = arith.constant 0.278868079 : f32
    %90 = vector.broadcast %cst_61 : f32 to vector<16x128xf32>
    %91 = arith.addf %90, %89 : vector<16x128xf32>
    %92 = arith.mulf %78, %91 : vector<16x128xf32>
    %cst_62 = arith.constant -0.186288059 : f32
    %93 = vector.broadcast %cst_62 : f32 to vector<16x128xf32>
    %94 = arith.addf %93, %92 : vector<16x128xf32>
    %95 = arith.mulf %78, %94 : vector<16x128xf32>
    %cst_63 = arith.constant 0.0967841818 : f32
    %96 = vector.broadcast %cst_63 : f32 to vector<16x128xf32>
    %97 = arith.addf %96, %95 : vector<16x128xf32>
    %98 = arith.mulf %78, %97 : vector<16x128xf32>
    %cst_64 = arith.constant 0.374091953 : f32
    %99 = vector.broadcast %cst_64 : f32 to vector<16x128xf32>
    %100 = arith.addf %99, %98 : vector<16x128xf32>
    %101 = arith.mulf %78, %100 : vector<16x128xf32>
    %cst_65 = arith.constant 1.00002372 : f32
    %102 = vector.broadcast %cst_65 : f32 to vector<16x128xf32>
    %103 = arith.addf %102, %101 : vector<16x128xf32>
    %104 = arith.mulf %78, %103 : vector<16x128xf32>
    %cst_66 = arith.constant -1.26551223 : f32
    %105 = vector.broadcast %cst_66 : f32 to vector<16x128xf32>
    %106 = arith.addf %105, %104 : vector<16x128xf32>
    %107 = math.log %78 : vector<16x128xf32>
    %108 = arith.mulf %73, %73 : vector<16x128xf32>
    %109 = arith.subf %106, %108 : vector<16x128xf32>
    %110 = arith.addf %107, %109 : vector<16x128xf32>
    %cst_67 = arith.constant 0.000000e+00 : f32
    %111 = vector.broadcast %cst_67 : f32 to vector<1x128xf32>
    %112 = arith.subf %111, %59 : vector<1x128xf32>
    %113 = vector.broadcast %112 : vector<1x128xf32> to vector<16x128xf32>
    %114 = arith.mulf %113, %110 : vector<16x128xf32>
    %115 = math.exp %114 : vector<16x128xf32>
    %cst_68 = arith.constant 1.000000e+00 : f32
    %116 = vector.broadcast %cst_68 : f32 to vector<16x128xf32>
    %117 = arith.subf %115, %116 : vector<16x128xf32>
    %118 = vector.broadcast %60 : vector<1x128xf32> to vector<16x128xf32>
    %119 = arith.mulf %117, %118 : vector<16x128xf32>
    %120 = arith.mulf %119, %69 : vector<16x128xf32>
    %121 = vector.broadcast %57 : vector<1x128xf32> to vector<16x128xf32>
    %122 = arith.mulf %121, %120 : vector<16x128xf32>
    %123 = arith.addf %71, %122 : vector<16x128xf32>
    %124 = vector.broadcast %61 : vector<1x128xf32> to vector<16x128xf32>
    %125 = arith.mulf %124, %64 : vector<16x128xf32>
    %cst_69 = arith.constant 1.000000e+00 : f32
    %126 = vector.broadcast %cst_69 : f32 to vector<16x128xf32>
    %127 = arith.addf %126, %125 : vector<16x128xf32>
    %128 = math.log %127 : vector<16x128xf32>
    %129 = vector.broadcast %62 : vector<1x128xf32> to vector<16x128xf32>
    %130 = arith.mulf %129, %128 : vector<16x128xf32>
    %131 = math.exp %130 : vector<16x128xf32>
    %cst_70 = arith.constant 9.99999997E-7 : f32
    %132 = vector.broadcast %cst_70 : f32 to vector<16x128xf32>
    %133 = arith.maximumf %131, %132 : vector<16x128xf32>
    %cst_71 = arith.constant 1.000000e+00 : f32
    %134 = vector.broadcast %cst_71 : f32 to vector<16x128xf32>
    %135 = arith.subf %134, %133 : vector<16x128xf32>
    %cst_72 = arith.constant 1.000000e+00 : f32
    %136 = vector.broadcast %cst_72 : f32 to vector<16x128xf32>
    %137 = arith.subf %136, %135 : vector<16x128xf32>
    %cst_73 = arith.constant 1.000000e+00 : f32
    %138 = vector.broadcast %cst_73 : f32 to vector<16x128xf32>
    %139 = arith.addf %138, %135 : vector<16x128xf32>
    %140 = arith.mulf %137, %139 : vector<16x128xf32>
    %141 = math.log %140 : vector<16x128xf32>
    %cst_74 = arith.constant 0.000000e+00 : f32
    %142 = vector.broadcast %cst_74 : f32 to vector<16x128xf32>
    %143 = arith.subf %142, %141 : vector<16x128xf32>
    %cst_75 = arith.constant 2.500000e+00 : f32
    %144 = vector.broadcast %cst_75 : f32 to vector<16x128xf32>
    %145 = arith.subf %143, %144 : vector<16x128xf32>
    %cst_76 = arith.constant 2.81022636E-8 : f32
    %146 = vector.broadcast %cst_76 : f32 to vector<16x128xf32>
    %147 = arith.mulf %146, %145 : vector<16x128xf32>
    %cst_77 = arith.constant 3.43273939E-7 : f32
    %148 = vector.broadcast %cst_77 : f32 to vector<16x128xf32>
    %149 = arith.addf %148, %147 : vector<16x128xf32>
    %150 = arith.mulf %149, %145 : vector<16x128xf32>
    %cst_78 = arith.constant -3.5233877E-6 : f32
    %151 = vector.broadcast %cst_78 : f32 to vector<16x128xf32>
    %152 = arith.addf %151, %150 : vector<16x128xf32>
    %153 = arith.mulf %152, %145 : vector<16x128xf32>
    %cst_79 = arith.constant -4.39150654E-6 : f32
    %154 = vector.broadcast %cst_79 : f32 to vector<16x128xf32>
    %155 = arith.addf %154, %153 : vector<16x128xf32>
    %156 = arith.mulf %155, %145 : vector<16x128xf32>
    %cst_80 = arith.constant 2.1858087E-4 : f32
    %157 = vector.broadcast %cst_80 : f32 to vector<16x128xf32>
    %158 = arith.addf %157, %156 : vector<16x128xf32>
    %159 = arith.mulf %158, %145 : vector<16x128xf32>
    %cst_81 = arith.constant -0.00125372503 : f32
    %160 = vector.broadcast %cst_81 : f32 to vector<16x128xf32>
    %161 = arith.addf %160, %159 : vector<16x128xf32>
    %162 = arith.mulf %161, %145 : vector<16x128xf32>
    %cst_82 = arith.constant -0.00417768164 : f32
    %163 = vector.broadcast %cst_82 : f32 to vector<16x128xf32>
    %164 = arith.addf %163, %162 : vector<16x128xf32>
    %165 = arith.mulf %164, %145 : vector<16x128xf32>
    %cst_83 = arith.constant 0.246640727 : f32
    %166 = vector.broadcast %cst_83 : f32 to vector<16x128xf32>
    %167 = arith.addf %166, %165 : vector<16x128xf32>
    %168 = arith.mulf %167, %145 : vector<16x128xf32>
    %cst_84 = arith.constant 1.50140941 : f32
    %169 = vector.broadcast %cst_84 : f32 to vector<16x128xf32>
    %170 = arith.addf %169, %168 : vector<16x128xf32>
    %171 = math.sqrt %143 : vector<16x128xf32>
    %cst_85 = arith.constant 3.000000e+00 : f32
    %172 = vector.broadcast %cst_85 : f32 to vector<16x128xf32>
    %173 = arith.subf %171, %172 : vector<16x128xf32>
    %cst_86 = arith.constant -2.00214257E-4 : f32
    %174 = vector.broadcast %cst_86 : f32 to vector<16x128xf32>
    %175 = arith.mulf %174, %173 : vector<16x128xf32>
    %cst_87 = arith.constant 1.00950558E-4 : f32
    %176 = vector.broadcast %cst_87 : f32 to vector<16x128xf32>
    %177 = arith.addf %176, %175 : vector<16x128xf32>
    %178 = arith.mulf %177, %173 : vector<16x128xf32>
    %cst_88 = arith.constant 0.00134934322 : f32
    %179 = vector.broadcast %cst_88 : f32 to vector<16x128xf32>
    %180 = arith.addf %179, %178 : vector<16x128xf32>
    %181 = arith.mulf %180, %173 : vector<16x128xf32>
    %cst_89 = arith.constant -0.00367342844 : f32
    %182 = vector.broadcast %cst_89 : f32 to vector<16x128xf32>
    %183 = arith.addf %182, %181 : vector<16x128xf32>
    %184 = arith.mulf %183, %173 : vector<16x128xf32>
    %cst_90 = arith.constant 0.00573950773 : f32
    %185 = vector.broadcast %cst_90 : f32 to vector<16x128xf32>
    %186 = arith.addf %185, %184 : vector<16x128xf32>
    %187 = arith.mulf %186, %173 : vector<16x128xf32>
    %cst_91 = arith.constant -0.0076224613 : f32
    %188 = vector.broadcast %cst_91 : f32 to vector<16x128xf32>
    %189 = arith.addf %188, %187 : vector<16x128xf32>
    %190 = arith.mulf %189, %173 : vector<16x128xf32>
    %cst_92 = arith.constant 0.00943887047 : f32
    %191 = vector.broadcast %cst_92 : f32 to vector<16x128xf32>
    %192 = arith.addf %191, %190 : vector<16x128xf32>
    %193 = arith.mulf %192, %173 : vector<16x128xf32>
    %cst_93 = arith.constant 1.00167406 : f32
    %194 = vector.broadcast %cst_93 : f32 to vector<16x128xf32>
    %195 = arith.addf %194, %193 : vector<16x128xf32>
    %196 = arith.mulf %195, %173 : vector<16x128xf32>
    %cst_94 = arith.constant 2.83297682 : f32
    %197 = vector.broadcast %cst_94 : f32 to vector<16x128xf32>
    %198 = arith.addf %197, %196 : vector<16x128xf32>
    %cst_95 = arith.constant 5.000000e+00 : f32
    %199 = vector.broadcast %cst_95 : f32 to vector<16x128xf32>
    %200 = arith.cmpf olt, %143, %199 : vector<16x128xf32>
    %201 = arith.select %200, %170, %198 : vector<16x128xi1>, vector<16x128xf32>
    %202 = arith.mulf %201, %135 : vector<16x128xf32>
    %203 = vector.broadcast %63 : vector<1x128xf32> to vector<16x128xf32>
    %204 = arith.mulf %203, %128 : vector<16x128xf32>
    %cst_96 = arith.constant -0.4515827 : f32
    %205 = vector.broadcast %cst_96 : f32 to vector<16x128xf32>
    %206 = arith.addf %205, %204 : vector<16x128xf32>
    %cst_97 = arith.constant 1.000000e-30 : f32
    %207 = vector.broadcast %cst_97 : f32 to vector<16x128xf32>
    %208 = arith.maximumf %206, %207 : vector<16x128xf32>
    %209 = math.log %208 : vector<16x128xf32>
    %210 = arith.subf %208, %209 : vector<16x128xf32>
    %211 = math.sqrt %210 : vector<16x128xf32>
    %cst_98 = arith.constant 0.707106769 : f32
    %212 = vector.broadcast %cst_98 : f32 to vector<16x128xf32>
    %213 = arith.mulf %211, %212 : vector<16x128xf32>
    %cst_99 = arith.constant 9.99999997E-7 : f32
    %214 = vector.broadcast %cst_99 : f32 to vector<16x128xf32>
    %215 = arith.cmpf ogt, %131, %214 : vector<16x128xf32>
    %216 = arith.select %215, %202, %213 : vector<16x128xi1>, vector<16x128xf32>
    %cst_100 = arith.constant 1.41421354 : f32
    %217 = vector.broadcast %cst_100 : f32 to vector<16x128xf32>
    %218 = arith.mulf %217, %216 : vector<16x128xf32>
    %219 = arith.mulf %218, %69 : vector<16x128xf32>
    %220 = vector.broadcast %58 : vector<1x128xf32> to vector<16x128xf32>
    %221 = arith.mulf %220, %219 : vector<16x128xf32>
    %222 = arith.addf %123, %221 : vector<16x128xf32>
    %c0_101 = arith.constant 0 : index
    %c0_102 = arith.constant 0 : index
    %223 = vector.load %arg9[%c0_101, %c0_102] : memref<16x128xf32, #tpu.memory_space<vmem>>, vector<16x128xf32>
    tpu.vector_store %arg9[%c0_101, %c0_102], %222 {strides = array<i32>} : memref<16x128xf32, #tpu.memory_space<vmem>>, vector<16x128xf32>,
    return
  }
  func.func @transform_0(%arg0: i32) -> (i32, i32) {
    %c0_i32 = arith.constant 0 : i32
    %c0_i32_0 = arith.constant 0 : i32
    return %arg0, %c0_i32 : i32, i32
  }
  func.func @transform_1(%arg0: i32) -> (i32, i32) {
    %c0_i32 = arith.constant 0 : i32
    %c0_i32_0 = arith.constant 0 : i32
    %c0_i32_1 = arith.constant 0 : i32
    return %c0_i32, %c0_i32_0 : i32, i32
  }
  func.func @transform_2(%arg0: i32) -> (i32, i32) {
    %c0_i32 = arith.constant 0 : i32
    %c0_i32_0 = arith.constant 0 : i32
    %c0_i32_1 = arith.constant 0 : i32
    return %c0_i32, %c0_i32_0 : i32, i32
  }
  func.func @transform_3(%arg0: i32) -> (i32, i32, i32, i32) {
    %c0_i32 = arith.constant 0 : i32
    %c0_i32_0 = arith.constant 0 : i32
    %c0_i32_1 = arith.constant 0 : i32
    %c0_i32_2 = arith.constant 0 : i32
    %c0_i32_3 = arith.constant 0 : i32
    return %c0_i32, %c0_i32_0, %c0_i32_1, %c0_i32_2 : i32, i32, i32, i32
  }
  func.func @transform_4(%arg0: i32) -> (i32, i32, i32, i32) {
    %c0_i32 = arith.constant 0 : i32
    %c0_i32_0 = arith.constant 0 : i32
    %c0_i32_1 = arith.constant 0 : i32
    %c0_i32_2 = arith.constant 0 : i32
    %c0_i32_3 = arith.constant 0 : i32
    return %c0_i32, %c0_i32_0, %c0_i32_1, %c0_i32_2 : i32, i32, i32, i32
  }
  func.func @transform_5(%arg0: i32) -> (i32, i32) {
    %c0_i32 = arith.constant 0 : i32
    %c0_i32_0 = arith.constant 0 : i32
    %c0_i32_1 = arith.constant 0 : i32
    return %c0_i32, %c0_i32_0 : i32, i32
  }
  func.func @transform_6(%arg0: i32) -> (i32, i32) {
    %c0_i32 = arith.constant 0 : i32
    %c0_i32_0 = arith.constant 0 : i32
    %c0_i32_1 = arith.constant 0 : i32
    return %c0_i32, %c0_i32_0 : i32, i32
  }
  func.func @transform_7(%arg0: i32) -> (i32, i32) {
    %c0_i32 = arith.constant 0 : i32
    %c0_i32_0 = arith.constant 0 : i32
    %c0_i32_1 = arith.constant 0 : i32
    return %c0_i32, %c0_i32_0 : i32, i32
  }
  func.func @transform_8(%arg0: i32) -> (i32, i32) {
    %c0_i32 = arith.constant 0 : i32
    %c0_i32_0 = arith.constant 0 : i32
    return %arg0, %c0_i32 : i32, i32
  }
}

module attributes {stable_mosaic.version = 11 : i64} {
  func.func @extreme_network_kernel(%arg0: i32, %arg1: memref<16x8xf32, #tpu.memory_space<vmem>>, %arg2: memref<8x128xbf16, #tpu.memory_space<vmem>>, %arg3: memref<1x128xf32, #tpu.memory_space<vmem>>, %arg4: memref<2x2x128x128xbf16, #tpu.memory_space<vmem>>, %arg5: memref<2x2x1x128xf32, #tpu.memory_space<vmem>>, %arg6: memref<128x128xbf16, #tpu.memory_space<vmem>>, %arg7: memref<1x128xf32, #tpu.memory_space<vmem>>, %arg8: memref<8x128xf32, #tpu.memory_space<vmem>>, %arg9: memref<16x128xf32, #tpu.memory_space<vmem>>) attributes {dimension_semantics = [#tpu.dimension_semantics<parallel>], iteration_bounds = array<i64: 1>, scalar_prefetch = 0 : i64, scratch_operands = 0 : i64, tpu.core_type = #tpu.core_type<tc>, window_params = [{transform_indices = @transform_0, window_bounds = array<i64: 16, 8>}, {pipeline_mode = #tpu.pipeline_mode<synchronous>, transform_indices = @transform_1, window_bounds = array<i64: 8, 128>}, {pipeline_mode = #tpu.pipeline_mode<synchronous>, transform_indices = @transform_2, window_bounds = array<i64: 1, 128>}, {pipeline_mode = #tpu.pipeline_mode<synchronous>, transform_indices = @transform_3, window_bounds = array<i64: 2, 2, 128, 128>}, {pipeline_mode = #tpu.pipeline_mode<synchronous>, transform_indices = @transform_4, window_bounds = array<i64: 2, 2, 1, 128>}, {pipeline_mode = #tpu.pipeline_mode<synchronous>, transform_indices = @transform_5, window_bounds = array<i64: 128, 128>}, {pipeline_mode = #tpu.pipeline_mode<synchronous>, transform_indices = @transform_6, window_bounds = array<i64: 1, 128>}, {pipeline_mode = #tpu.pipeline_mode<synchronous>, transform_indices = @transform_7, window_bounds = array<i64: 8, 128>}, {transform_indices = @transform_8, window_bounds = array<i64: 16, 128>}]} {
    %c0 = arith.constant 0 : index
    %c0_0 = arith.constant 0 : index
    %0 = vector.load %arg1[%c0, %c0_0] : memref<16x8xf32, #tpu.memory_space<vmem>>, vector<16x8xf32>
    %1 = arith.truncf %0 : vector<16x8xf32> to vector<16x8xbf16>
    %c0_1 = arith.constant 0 : index
    %c0_2 = arith.constant 0 : index
    %2 = vector.load %arg2[%c0_1, %c0_2] : memref<8x128xbf16, #tpu.memory_space<vmem>>, vector<8x128xbf16>
    %cst = arith.constant dense<0.000000e+00> : vector<16x128xf32>
    %3 = tpu.matmul %1, %2, %cst {dimension_numbers = #tpu.dot_dimension_numbers<[1], [0], [0], [1], [0, 0, 1, 1], [], []>} : vector<16x8xbf16>, vector<8x128xbf16>, vector<16x128xf32> -> vector<16x128xf32>
    %c0_3 = arith.constant 0 : index
    %c0_4 = arith.constant 0 : index
    %4 = vector.load %arg3[%c0_3, %c0_4] : memref<1x128xf32, #tpu.memory_space<vmem>>, vector<1x128xf32>
    %5 = vector.broadcast %4 : vector<1x128xf32> to vector<16x128xf32>
    %6 = arith.addf %3, %5 : vector<16x128xf32>
    %cst_5 = arith.constant 0.000000e+00 : f32
    %7 = vector.broadcast %cst_5 : f32 to vector<16x128xf32>
    %8 = arith.maximumf %6, %7 : vector<16x128xf32>
    %9 = arith.truncf %8 : vector<16x128xf32> to vector<16x128xbf16>
    %c0_6 = arith.constant 0 : index
    %c0_7 = arith.constant 0 : index
    %c0_8 = arith.constant 0 : index
    %c0_9 = arith.constant 0 : index
    %10 = vector.load %arg4[%c0_6, %c0_7, %c0_8, %c0_9] : memref<2x2x128x128xbf16, #tpu.memory_space<vmem>>, vector<1x1x128x128xbf16>
    %11 = vector.shape_cast %10 : vector<1x1x128x128xbf16> to vector<128x128xbf16>
    %cst_10 = arith.constant dense<0.000000e+00> : vector<16x128xf32>
    %12 = tpu.matmul %9, %11, %cst_10 {dimension_numbers = #tpu.dot_dimension_numbers<[1], [0], [0], [1], [0, 0, 1, 1], [], []>} : vector<16x128xbf16>, vector<128x128xbf16>, vector<16x128xf32> -> vector<16x128xf32>
    %c0_11 = arith.constant 0 : index
    %c0_12 = arith.constant 0 : index
    %c0_13 = arith.constant 0 : index
    %c0_14 = arith.constant 0 : index
    %13 = vector.load %arg5[%c0_11, %c0_12, %c0_13, %c0_14] : memref<2x2x1x128xf32, #tpu.memory_space<vmem>>, vector<1x1x1x128xf32>
    %14 = vector.shape_cast %13 : vector<1x1x1x128xf32> to vector<1x128xf32>
    %15 = vector.broadcast %14 : vector<1x128xf32> to vector<16x128xf32>
    %16 = arith.addf %12, %15 : vector<16x128xf32>
    %cst_15 = arith.constant 0.000000e+00 : f32
    %17 = vector.broadcast %cst_15 : f32 to vector<16x128xf32>
    %18 = arith.maximumf %16, %17 : vector<16x128xf32>
    %19 = arith.truncf %18 : vector<16x128xf32> to vector<16x128xbf16>
    %c0_16 = arith.constant 0 : index
    %c1 = arith.constant 1 : index
    %c0_17 = arith.constant 0 : index
    %c0_18 = arith.constant 0 : index
    %20 = vector.load %arg4[%c0_16, %c1, %c0_17, %c0_18] : memref<2x2x128x128xbf16, #tpu.memory_space<vmem>>, vector<1x1x128x128xbf16>
    %21 = vector.shape_cast %20 : vector<1x1x128x128xbf16> to vector<128x128xbf16>
    %cst_19 = arith.constant dense<0.000000e+00> : vector<16x128xf32>
    %22 = tpu.matmul %19, %21, %cst_19 {dimension_numbers = #tpu.dot_dimension_numbers<[1], [0], [0], [1], [0, 0, 1, 1], [], []>} : vector<16x128xbf16>, vector<128x128xbf16>, vector<16x128xf32> -> vector<16x128xf32>
    %c0_20 = arith.constant 0 : index
    %c1_21 = arith.constant 1 : index
    %c0_22 = arith.constant 0 : index
    %c0_23 = arith.constant 0 : index
    %23 = vector.load %arg5[%c0_20, %c1_21, %c0_22, %c0_23] : memref<2x2x1x128xf32, #tpu.memory_space<vmem>>, vector<1x1x1x128xf32>
    %24 = vector.shape_cast %23 : vector<1x1x1x128xf32> to vector<1x128xf32>
    %25 = vector.broadcast %24 : vector<1x128xf32> to vector<16x128xf32>
    %26 = arith.addf %22, %25 : vector<16x128xf32>
    %27 = arith.addf %6, %26 : vector<16x128xf32>
    %cst_24 = arith.constant 0.000000e+00 : f32
    %28 = vector.broadcast %cst_24 : f32 to vector<16x128xf32>
    %29 = arith.maximumf %27, %28 : vector<16x128xf32>
    %30 = arith.truncf %29 : vector<16x128xf32> to vector<16x128xbf16>
    %c1_25 = arith.constant 1 : index
    %c0_26 = arith.constant 0 : index
    %c0_27 = arith.constant 0 : index
    %c0_28 = arith.constant 0 : index
    %31 = vector.load %arg4[%c1_25, %c0_26, %c0_27, %c0_28] : memref<2x2x128x128xbf16, #tpu.memory_space<vmem>>, vector<1x1x128x128xbf16>
    %32 = vector.shape_cast %31 : vector<1x1x128x128xbf16> to vector<128x128xbf16>
    %cst_29 = arith.constant dense<0.000000e+00> : vector<16x128xf32>
    %33 = tpu.matmul %30, %32, %cst_29 {dimension_numbers = #tpu.dot_dimension_numbers<[1], [0], [0], [1], [0, 0, 1, 1], [], []>} : vector<16x128xbf16>, vector<128x128xbf16>, vector<16x128xf32> -> vector<16x128xf32>
    %c1_30 = arith.constant 1 : index
    %c0_31 = arith.constant 0 : index
    %c0_32 = arith.constant 0 : index
    %c0_33 = arith.constant 0 : index
    %34 = vector.load %arg5[%c1_30, %c0_31, %c0_32, %c0_33] : memref<2x2x1x128xf32, #tpu.memory_space<vmem>>, vector<1x1x1x128xf32>
    %35 = vector.shape_cast %34 : vector<1x1x1x128xf32> to vector<1x128xf32>
    %36 = vector.broadcast %35 : vector<1x128xf32> to vector<16x128xf32>
    %37 = arith.addf %33, %36 : vector<16x128xf32>
    %cst_34 = arith.constant 0.000000e+00 : f32
    %38 = vector.broadcast %cst_34 : f32 to vector<16x128xf32>
    %39 = arith.maximumf %37, %38 : vector<16x128xf32>
    %40 = arith.truncf %39 : vector<16x128xf32> to vector<16x128xbf16>
    %c1_35 = arith.constant 1 : index
    %c1_36 = arith.constant 1 : index
    %c0_37 = arith.constant 0 : index
    %c0_38 = arith.constant 0 : index
    %41 = vector.load %arg4[%c1_35, %c1_36, %c0_37, %c0_38] : memref<2x2x128x128xbf16, #tpu.memory_space<vmem>>, vector<1x1x128x128xbf16>
    %42 = vector.shape_cast %41 : vector<1x1x128x128xbf16> to vector<128x128xbf16>
    %cst_39 = arith.constant dense<0.000000e+00> : vector<16x128xf32>
    %43 = tpu.matmul %40, %42, %cst_39 {dimension_numbers = #tpu.dot_dimension_numbers<[1], [0], [0], [1], [0, 0, 1, 1], [], []>} : vector<16x128xbf16>, vector<128x128xbf16>, vector<16x128xf32> -> vector<16x128xf32>
    %c1_40 = arith.constant 1 : index
    %c1_41 = arith.constant 1 : index
    %c0_42 = arith.constant 0 : index
    %c0_43 = arith.constant 0 : index
    %44 = vector.load %arg5[%c1_40, %c1_41, %c0_42, %c0_43] : memref<2x2x1x128xf32, #tpu.memory_space<vmem>>, vector<1x1x1x128xf32>
    %45 = vector.shape_cast %44 : vector<1x1x1x128xf32> to vector<1x128xf32>
    %46 = vector.broadcast %45 : vector<1x128xf32> to vector<16x128xf32>
    %47 = arith.addf %43, %46 : vector<16x128xf32>
    %48 = arith.addf %27, %47 : vector<16x128xf32>
    %49 = arith.truncf %48 : vector<16x128xf32> to vector<16x128xbf16>
    %c0_44 = arith.constant 0 : index
    %c0_45 = arith.constant 0 : index
    %50 = vector.load %arg6[%c0_44, %c0_45] : memref<128x128xbf16, #tpu.memory_space<vmem>>, vector<128x128xbf16>
    %cst_46 = arith.constant dense<0.000000e+00> : vector<16x128xf32>
    %51 = tpu.matmul %49, %50, %cst_46 {dimension_numbers = #tpu.dot_dimension_numbers<[1], [0], [0], [1], [0, 0, 1, 1], [], []>} : vector<16x128xbf16>, vector<128x128xbf16>, vector<16x128xf32> -> vector<16x128xf32>
    %c0_47 = arith.constant 0 : index
    %c0_48 = arith.constant 0 : index
    %52 = vector.load %arg7[%c0_47, %c0_48] : memref<1x128xf32, #tpu.memory_space<vmem>>, vector<1x128xf32>
    %53 = vector.broadcast %52 : vector<1x128xf32> to vector<16x128xf32>
    %54 = arith.addf %51, %53 : vector<16x128xf32>
    %c0_49 = arith.constant 0 : index
    %c0_50 = arith.constant 0 : index
    %55 = vector.load %arg8[%c0_49, %c0_50] : memref<8x128xf32, #tpu.memory_space<vmem>>, vector<8x128xf32>
    %56 = vector.extract_strided_slice %55 {offsets = [0, 0], sizes = [1, 128], strides = [1, 1]} : vector<8x128xf32> to vector<1x128xf32>
    %57 = vector.extract_strided_slice %55 {offsets = [1, 0], sizes = [1, 128], strides = [1, 1]} : vector<8x128xf32> to vector<1x128xf32>
    %58 = vector.extract_strided_slice %55 {offsets = [2, 0], sizes = [1, 128], strides = [1, 1]} : vector<8x128xf32> to vector<1x128xf32>
    %59 = vector.extract_strided_slice %55 {offsets = [3, 0], sizes = [1, 128], strides = [1, 1]} : vector<8x128xf32> to vector<1x128xf32>
    %60 = vector.extract_strided_slice %55 {offsets = [4, 0], sizes = [1, 128], strides = [1, 1]} : vector<8x128xf32> to vector<1x128xf32>
    %61 = vector.extract_strided_slice %55 {offsets = [5, 0], sizes = [1, 128], strides = [1, 1]} : vector<8x128xf32> to vector<1x128xf32>
    %62 = vector.extract_strided_slice %55 {offsets = [6, 0], sizes = [1, 128], strides = [1, 1]} : vector<8x128xf32> to vector<1x128xf32>
    %63 = vector.extract_strided_slice %55 {offsets = [7, 0], sizes = [1, 128], strides = [1, 1]} : vector<8x128xf32> to vector<1x128xf32>
    %64 = math.absf %54 : vector<16x128xf32>
    %cst_51 = arith.constant 0.000000e+00 : f32
    %65 = vector.broadcast %cst_51 : f32 to vector<16x128xf32>
    %66 = arith.cmpf oge, %54, %65 : vector<16x128xf32>
    %cst_52 = arith.constant 1.000000e+00 : f32
    %cst_53 = arith.constant -1.000000e+00 : f32
    %67 = vector.broadcast %cst_52 : f32 to vector<16x128xf32>
    %68 = vector.broadcast %cst_53 : f32 to vector<16x128xf32>
    %69 = arith.select %66, %67, %68 : vector<16x128xi1>, vector<16x128xf32>
    %70 = vector.broadcast %56 : vector<1x128xf32> to vector<16x128xf32>
    %71 = arith.mulf %70, %54 : vector<16x128xf32>
    %cst_54 = arith.constant 0.707106769 : f32
    %72 = vector.broadcast %cst_54 : f32 to vector<16x128xf32>
    %73 = arith.mulf %64, %72 : vector<16x128xf32>
    %cst_55 = arith.constant 5.000000e-01 : f32
    %74 = vector.broadcast %cst_55 : f32 to vector<16x128xf32>
    %75 = arith.mulf %74, %73 : vector<16x128xf32>
    %cst_56 = arith.constant 1.000000e+00 : f32
    %76 = vector.broadcast %cst_56 : f32 to vector<16x128xf32>
    %77 = arith.addf %76, %75 : vector<16x128xf32>
    %78 = tpu.reciprocal %77 {approx = true} : vector<16x128xf32> -> vector<16x128xf32>
    %cst_57 = arith.constant 0.170872763 : f32
    %79 = vector.broadcast %cst_57 : f32 to vector<16x128xf32>
    %80 = arith.mulf %78, %79 : vector<16x128xf32>
    %cst_58 = arith.constant -0.822152256 : f32
    %81 = vector.broadcast %cst_58 : f32 to vector<16x128xf32>
    %82 = arith.addf %81, %80 : vector<16x128xf32>
    %83 = arith.mulf %78, %82 : vector<16x128xf32>
    %cst_59 = arith.constant 1.48851585 : f32
    %84 = vector.broadcast %cst_59 : f32 to vector<16x128xf32>
    %85 = arith.addf %84, %83 : vector<16x128xf32>
    %86 = arith.mulf %78, %85 : vector<16x128xf32>
    %cst_60 = arith.constant -1.13520396 : f32
    %87 = vector.broadcast %cst_60 : f32 to vector<16x128xf32>
    %88 = arith.addf %87, %86 : vector<16x128xf32>
    %89 = arith.mulf %78, %88 : vector<16x128xf32>
    %cst_61 = arith.constant 0.278868079 : f32
    %90 = vector.broadcast %cst_61 : f32 to vector<16x128xf32>
    %91 = arith.addf %90, %89 : vector<16x128xf32>
    %92 = arith.mulf %78, %91 : vector<16x128xf32>
    %cst_62 = arith.constant -0.186288059 : f32
    %93 = vector.broadcast %cst_62 : f32 to vector<16x128xf32>
    %94 = arith.addf %93, %92 : vector<16x128xf32>
    %95 = arith.mulf %78, %94 : vector<16x128xf32>
    %cst_63 = arith.constant 0.0967841818 : f32
    %96 = vector.broadcast %cst_63 : f32 to vector<16x128xf32>
    %97 = arith.addf %96, %95 : vector<16x128xf32>
    %98 = arith.mulf %78, %97 : vector<16x128xf32>
    %cst_64 = arith.constant 0.374091953 : f32
    %99 = vector.broadcast %cst_64 : f32 to vector<16x128xf32>
    %100 = arith.addf %99, %98 : vector<16x128xf32>
    %101 = arith.mulf %78, %100 : vector<16x128xf32>
    %cst_65 = arith.constant 1.00002372 : f32
    %102 = vector.broadcast %cst_65 : f32 to vector<16x128xf32>
    %103 = arith.addf %102, %101 : vector<16x128xf32>
    %104 = arith.mulf %78, %103 : vector<16x128xf32>
    %cst_66 = arith.constant -1.26551223 : f32
    %105 = vector.broadcast %cst_66 : f32 to vector<16x128xf32>
    %106 = arith.addf %105, %104 : vector<16x128xf32>
    %107 = math.log %78 : vector<16x128xf32>
    %108 = arith.mulf %73, %73 : vector<16x128xf32>
    %109 = arith.subf %106, %108 : vector<16x128xf32>
    %110 = arith.addf %107, %109 : vector<16x128xf32>
    %cst_67 = arith.constant 0.000000e+00 : f32
    %111 = vector.broadcast %cst_67 : f32 to vector<1x128xf32>
    %112 = arith.subf %111, %59 : vector<1x128xf32>
    %113 = vector.broadcast %112 : vector<1x128xf32> to vector<16x128xf32>
    %114 = arith.mulf %113, %110 : vector<16x128xf32>
    %115 = math.exp %114 : vector<16x128xf32>
    %cst_68 = arith.constant 1.000000e+00 : f32
    %116 = vector.broadcast %cst_68 : f32 to vector<16x128xf32>
    %117 = arith.subf %115, %116 : vector<16x128xf32>
    %118 = vector.broadcast %60 : vector<1x128xf32> to vector<16x128xf32>
    %119 = arith.mulf %117, %118 : vector<16x128xf32>
    %120 = arith.mulf %119, %69 : vector<16x128xf32>
    %121 = vector.broadcast %57 : vector<1x128xf32> to vector<16x128xf32>
    %122 = arith.mulf %121, %120 : vector<16x128xf32>
    %123 = arith.addf %71, %122 : vector<16x128xf32>
    %124 = vector.broadcast %61 : vector<1x128xf32> to vector<16x128xf32>
    %125 = arith.mulf %124, %64 : vector<16x128xf32>
    %cst_69 = arith.constant 1.000000e+00 : f32
    %126 = vector.broadcast %cst_69 : f32 to vector<16x128xf32>
    %127 = arith.addf %126, %125 : vector<16x128xf32>
    %128 = math.log %127 : vector<16x128xf32>
    %129 = vector.broadcast %62 : vector<1x128xf32> to vector<16x128xf32>
    %130 = arith.mulf %129, %128 : vector<16x128xf32>
    %131 = math.exp %130 : vector<16x128xf32>
    %cst_70 = arith.constant 9.99999997E-7 : f32
    %132 = vector.broadcast %cst_70 : f32 to vector<16x128xf32>
    %133 = arith.maximumf %131, %132 : vector<16x128xf32>
    %cst_71 = arith.constant 1.000000e+00 : f32
    %134 = vector.broadcast %cst_71 : f32 to vector<16x128xf32>
    %135 = arith.subf %134, %133 : vector<16x128xf32>
    %cst_72 = arith.constant 1.000000e+00 : f32
    %136 = vector.broadcast %cst_72 : f32 to vector<16x128xf32>
    %137 = arith.subf %136, %135 : vector<16x128xf32>
    %cst_73 = arith.constant 1.000000e+00 : f32
    %138 = vector.broadcast %cst_73 : f32 to vector<16x128xf32>
    %139 = arith.addf %138, %135 : vector<16x128xf32>
    %140 = arith.mulf %137, %139 : vector<16x128xf32>
    %141 = math.log %140 : vector<16x128xf32>
    %cst_74 = arith.constant 0.000000e+00 : f32
    %142 = vector.broadcast %cst_74 : f32 to vector<16x128xf32>
    %143 = arith.subf %142, %141 : vector<16x128xf32>
    %cst_75 = arith.constant 2.500000e+00 : f32
    %144 = vector.broadcast %cst_75 : f32 to vector<16x128xf32>
    %145 = arith.subf %143, %144 : vector<16x128xf32>
    %cst_76 = arith.constant 2.81022636E-8 : f32
    %146 = vector.broadcast %cst_76 : f32 to vector<16x128xf32>
    %147 = arith.mulf %146, %145 : vector<16x128xf32>
    %cst_77 = arith.constant 3.43273939E-7 : f32
    %148 = vector.broadcast %cst_77 : f32 to vector<16x128xf32>
    %149 = arith.addf %148, %147 : vector<16x128xf32>
    %150 = arith.mulf %149, %145 : vector<16x128xf32>
    %cst_78 = arith.constant -3.5233877E-6 : f32
    %151 = vector.broadcast %cst_78 : f32 to vector<16x128xf32>
    %152 = arith.addf %151, %150 : vector<16x128xf32>
    %153 = arith.mulf %152, %145 : vector<16x128xf32>
    %cst_79 = arith.constant -4.39150654E-6 : f32
    %154 = vector.broadcast %cst_79 : f32 to vector<16x128xf32>
    %155 = arith.addf %154, %153 : vector<16x128xf32>
    %156 = arith.mulf %155, %145 : vector<16x128xf32>
    %cst_80 = arith.constant 2.1858087E-4 : f32
    %157 = vector.broadcast %cst_80 : f32 to vector<16x128xf32>
    %158 = arith.addf %157, %156 : vector<16x128xf32>
    %159 = arith.mulf %158, %145 : vector<16x128xf32>
    %cst_81 = arith.constant -0.00125372503 : f32
    %160 = vector.broadcast %cst_81 : f32 to vector<16x128xf32>
    %161 = arith.addf %160, %159 : vector<16x128xf32>
    %162 = arith.mulf %161, %145 : vector<16x128xf32>
    %cst_82 = arith.constant -0.00417768164 : f32
    %163 = vector.broadcast %cst_82 : f32 to vector<16x128xf32>
    %164 = arith.addf %163, %162 : vector<16x128xf32>
    %165 = arith.mulf %164, %145 : vector<16x128xf32>
    %cst_83 = arith.constant 0.246640727 : f32
    %166 = vector.broadcast %cst_83 : f32 to vector<16x128xf32>
    %167 = arith.addf %166, %165 : vector<16x128xf32>
    %168 = arith.mulf %167, %145 : vector<16x128xf32>
    %cst_84 = arith.constant 1.50140941 : f32
    %169 = vector.broadcast %cst_84 : f32 to vector<16x128xf32>
    %170 = arith.addf %169, %168 : vector<16x128xf32>
    %171 = math.sqrt %143 : vector<16x128xf32>
    %cst_85 = arith.constant 3.000000e+00 : f32
    %172 = vector.broadcast %cst_85 : f32 to vector<16x128xf32>
    %173 = arith.subf %171, %172 : vector<16x128xf32>
    %cst_86 = arith.constant -2.00214257E-4 : f32
    %174 = vector.broadcast %cst_86 : f32 to vector<16x128xf32>
    %175 = arith.mulf %174, %173 : vector<16x128xf32>
    %cst_87 = arith.constant 1.00950558E-4 : f32
    %176 = vector.broadcast %cst_87 : f32 to vector<16x128xf32>
    %177 = arith.addf %176, %175 : vector<16x128xf32>
    %178 = arith.mulf %177, %173 : vector<16x128xf32>
    %cst_88 = arith.constant 0.00134934322 : f32
    %179 = vector.broadcast %cst_88 : f32 to vector<16x128xf32>
    %180 = arith.addf %179, %178 : vector<16x128xf32>
    %181 = arith.mulf %180, %173 : vector<16x128xf32>
    %cst_89 = arith.constant -0.00367342844 : f32
    %182 = vector.broadcast %cst_89 : f32 to vector<16x128xf32>
    %183 = arith.addf %182, %181 : vector<16x128xf32>
    %184 = arith.mulf %183, %173 : vector<16x128xf32>
    %cst_90 = arith.constant 0.00573950773 : f32
    %185 = vector.broadcast %cst_90 : f32 to vector<16x128xf32>
    %186 = arith.addf %185, %184 : vector<16x128xf32>
    %187 = arith.mulf %186, %173 : vector<16x128xf32>
    %cst_91 = arith.constant -0.0076224613 : f32
    %188 = vector.broadcast %cst_91 : f32 to vector<16x128xf32>
    %189 = arith.addf %188, %187 : vector<16x128xf32>
    %190 = arith.mulf %189, %173 : vector<16x128xf32>
    %cst_92 = arith.constant 0.00943887047 : f32
    %191 = vector.broadcast %cst_92 : f32 to vector<16x128xf32>
    %192 = arith.addf %191, %190 : vector<16x128xf32>
    %193 = arith.mulf %192, %173 : vector<16x128xf32>
    %cst_93 = arith.constant 1.00167406 : f32
    %194 = vector.broadcast %cst_93 : f32 to vector<16x128xf32>
    %195 = arith.addf %194, %193 : vector<16x128xf32>
    %196 = arith.mulf %195, %173 : vector<16x128xf32>
    %cst_94 = arith.constant 2.83297682 : f32
    %197 = vector.broadcast %cst_94 : f32 to vector<16x128xf32>
    %198 = arith.addf %197, %196 : vector<16x128xf32>
    %cst_95 = arith.constant 5.000000e+00 : f32
    %199 = vector.broadcast %cst_95 : f32 to vector<16x128xf32>
    %200 = arith.cmpf olt, %143, %199 : vector<16x128xf32>
    %201 = arith.select %200, %170, %198 : vector<16x128xi1>, vector<16x128xf32>
    %202 = arith.mulf %201, %135 : vector<16x128xf32>
    %203 = vector.broadcast %63 : vector<1x128xf32> to vector<16x128xf32>
    %204 = arith.mulf %203, %128 : vector<16x128xf32>
    %cst_96 = arith.constant -0.4515827 : f32
    %205 = vector.broadcast %cst_96 : f32 to vector<16x128xf32>
    %206 = arith.addf %205, %204 : vector<16x128xf32>
    %cst_97 = arith.constant 1.000000e-30 : f32
    %207 = vector.broadcast %cst_97 : f32 to vector<16x128xf32>
    %208 = arith.maximumf %206, %207 : vector<16x128xf32>
    %209 = math.log %208 : vector<16x128xf32>
    %210 = arith.subf %208, %209 : vector<16x128xf32>
    %211 = math.sqrt %210 : vector<16x128xf32>
    %cst_98 = arith.constant 0.707106769 : f32
    %212 = vector.broadcast %cst_98 : f32 to vector<16x128xf32>
    %213 = arith.mulf %211, %212 : vector<16x128xf32>
    %cst_99 = arith.constant 9.99999997E-7 : f32
    %214 = vector.broadcast %cst_99 : f32 to vector<16x128xf32>
    %215 = arith.cmpf ogt, %131, %214 : vector<16x128xf32>
    %216 = arith.select %215, %202, %213 : vector<16x128xi1>, vector<16x128xf32>
    %cst_100 = arith.constant 1.41421354 : f32
    %217 = vector.broadcast %cst_100 : f32 to vector<16x128xf32>
    %218 = arith.mulf %217, %216 : vector<16x128xf32>
    %219 = arith.mulf %218, %69 : vector<16x128xf32>
    %220 = vector.broadcast %58 : vector<1x128xf32> to vector<16x128xf32>
    %221 = arith.mulf %220, %219 : vector<16x128xf32>
    %222 = arith.addf %123, %221 : vector<16x128xf32>
    %c0_101 = arith.constant 0 : index
    %c0_102 = arith.constant 0 : index
    %223 = vector.load %arg9[%c0_101, %c0_102] : memref<16x128xf32, #tpu.memory_space<vmem>>, vector<16x128xf32>
    tpu.vector_store %arg9[%c0_101, %c0_102], %222 {strides = array<i32>} : memref<16x128xf32, #tpu.memory_space<vmem>>, vector<16x128xf32>,
    return
  }
  func.func @transform_0(%arg0: i32) -> (i32, i32) {
    %c0_i32 = arith.constant 0 : i32
    %c0_i32_0 = arith.constant 0 : i32
    return %arg0, %c0_i32 : i32, i32
  }
  func.func @transform_1(%arg0: i32) -> (i32, i32) {
    %c0_i32 = arith.constant 0 : i32
    %c0_i32_0 = arith.constant 0 : i32
    %c0_i32_1 = arith.constant 0 : i32
    return %c0_i32, %c0_i32_0 : i32, i32
  }
  func.func @transform_2(%arg0: i32) -> (i32, i32) {
    %c0_i32 = arith.constant 0 : i32
    %c0_i32_0 = arith.constant 0 : i32
    %c0_i32_1 = arith.constant 0 : i32
    return %c0_i32, %c0_i32_0 : i32, i32
  }
  func.func @transform_3(%arg0: i32) -> (i32, i32, i32, i32) {
    %c0_i32 = arith.constant 0 : i32
    %c0_i32_0 = arith.constant 0 : i32
    %c0_i32_1 = arith.constant 0 : i32
    %c0_i32_2 = arith.constant 0 : i32
    %c0_i32_3 = arith.constant 0 : i32
    return %c0_i32, %c0_i32_0, %c0_i32_1, %c0_i32_2 : i32, i32, i32, i32
  }
  func.func @transform_4(%arg0: i32) -> (i32, i32, i32, i32) {
    %c0_i32 = arith.constant 0 : i32
    %c0_i32_0 = arith.constant 0 : i32
    %c0_i32_1 = arith.constant 0 : i32
    %c0_i32_2 = arith.constant 0 : i32
    %c0_i32_3 = arith.constant 0 : i32
    return %c0_i32, %c0_i32_0, %c0_i32_1, %c0_i32_2 : i32, i32, i32, i32
  }
  func.func @transform_5(%arg0: i32) -> (i32, i32) {
    %c0_i32 = arith.constant 0 : i32
    %c0_i32_0 = arith.constant 0 : i32
    %c0_i32_1 = arith.constant 0 : i32
    return %c0_i32, %c0_i32_0 : i32, i32
  }
  func.func @transform_6(%arg0: i32) -> (i32, i32) {
    %c0_i32 = arith.constant 0 : i32
    %c0_i32_0 = arith.constant 0 : i32
    %c0_i32_1 = arith.constant 0 : i32
    return %c0_i32, %c0_i32_0 : i32, i32
  }
  func.func @transform_7(%arg0: i32) -> (i32, i32) {
    %c0_i32 = arith.constant 0 : i32
    %c0_i32_0 = arith.constant 0 : i32
    %c0_i32_1 = arith.constant 0 : i32
    return %c0_i32, %c0_i32_0 : i32, i32
  }
  func.func @transform_8(%arg0: i32) -> (i32, i32) {
    %c0_i32 = arith.constant 0 : i32
    %c0_i32_0 = arith.constant 0 : i32
    return %arg0, %c0_i32 : i32, i32
  }
}

</mosaic_0001>

<llo_original>
// kernel: tpu_custom_call.1
$region0: #{tpu_custom_call.1}
  #allocation0 [shape = 'u32[]', space=smem, size = 0x4, offset = 0x4, fixed_abs, tag = 'smem constant byte address 0x4 - core index']
  #allocation1 [shape = 'u32[144,128]{1,0:T(1,128)}', space=vmem, size = 0x12000, scoped, tag = 'internal scratch']
  %s0 = inlined_call_operand.vmem [shape: f32[16,8], index: 0, kind: input, shape index: {}]
  %s1 = inlined_call_operand.vmem [shape: bf16[8,128], index: 1, kind: input, shape index: {}]
  %s2 = inlined_call_operand.vmem [shape: f32[1,128], index: 2, kind: input, shape index: {}]
  %s3 = inlined_call_operand.hbm [shape: bf16[2,2,128,128], index: 3, kind: input, shape index: {}]
  %s4 = inlined_call_operand.vmem [shape: f32[2,2,1,128], index: 4, kind: input, shape index: {}]
  %s5 = inlined_call_operand.hbm [shape: bf16[128,128], index: 5, kind: input, shape index: {}]
  %s6 = inlined_call_operand.vmem [shape: f32[1,128], index: 6, kind: input, shape index: {}]
  %s7 = inlined_call_operand.vmem [shape: f32[8,128], index: 7, kind: input, shape index: {}]
  %s8 = inlined_call_operand.hbm [shape: f32[16,128], index: 8, kind: output, shape index: {}]
  %s9 = sld [smem:[#allocation0]]
  $region50: #{tpu_custom_call.1} parent=0
    _
  %s11 = ssub.s32 1, %s9
  %s12 = scalar_select 0, %s11, %s9
  $region1: #{tpu_custom_call.1} parent=0
    #allocation2 [shape = 'u8[131072]{0}', space=vmem, size = 0x20000, scoped, tag = 'input window, operand 3, single buffered']
    #allocation3 [shape = 's32[1]{0}', space=sflag, size = 0x4, scoped, tag = 'scoped memory for tpu_custom_call.1']
    #allocation4 [shape = 's32[1]{0}', space=sflag, size = 0x4, scoped, tag = 'scoped memory for tpu_custom_call.1']
    #allocation5 [shape = 'u8[32768]{0}', space=vmem, size = 0x8000, scoped, tag = 'input window, operand 5, single buffered']
    #allocation6 [shape = 's32[1]{0}', space=sflag, size = 0x4, scoped, tag = 'scoped memory for tpu_custom_call.1']
    #allocation7 [shape = 'u8[8192]{0}', space=vmem, size = 0x2000, scoped, tag = 'output window, operand 0, single buffered']
    %13 = vsyncpa [#allocation3], 0
    %14 = vsyncpa [#allocation6], 0
    %15 = vsyncpa [#allocation4], 0
    // Predicated region
    $region2: #{tpu_custom_call.1} parent=1 // pred_check
      _
    $region3: #{tpu_custom_call.1} parent=1 // pred_check_branch
      %17 = sbr.rel (0) target = $region5
    $region4: #{tpu_custom_call.1} parent=1 // pred_region
      _
    $region5: #{tpu_custom_call.1} parent=1 // pred_fallthru
      _
    // Predicated region
    $region6: #{tpu_custom_call.1} parent=1 // pred_check
      _
    $region7: #{tpu_custom_call.1} parent=1 // pred_check_branch
      %19 = sbr.rel (0) target = $region9
    $region8: #{tpu_custom_call.1} parent=1 // pred_region
      _
    $region9: #{tpu_custom_call.1} parent=1 // pred_fallthru
      _
    // Predicated region
    $region10: #{tpu_custom_call.1} parent=1 // pred_check
      _
    $region11: #{tpu_custom_call.1} parent=1 // pred_check_branch
      %21 = sbr.rel (0) target = $region13
    $region12: #{tpu_custom_call.1} parent=1 // pred_region
      _
    $region13: #{tpu_custom_call.1} parent=1 // pred_fallthru
      _
    // Predicated region
    $region14: #{tpu_custom_call.1} parent=1 // pred_check
      _
    $region15: #{tpu_custom_call.1} parent=1 // pred_check_branch
      %23 = sbr.rel (0) target = $region17
    $region16: #{tpu_custom_call.1} parent=1 // pred_region
      %s25 = ssub.s32 4096, 4096
      %26 = vsyncadd [#allocation3], %s25
      %s27 = sshll.u32 [#allocation2], 4
      %s28 = int_to_ptr.vmem [resolvable:$true] %s27
      %33 = dma.hbm_to_vmem [thread:$0]  %s3, 4096, %s28, [#allocation3], 64, 64, 4
    $region17: #{tpu_custom_call.1} parent=1 // pred_fallthru
      _
    // Predicated region
    $region18: #{tpu_custom_call.1} parent=1 // pred_check
      _
    $region19: #{tpu_custom_call.1} parent=1 // pred_check_branch
      %35 = sbr.rel (0) target = $region21
    $region20: #{tpu_custom_call.1} parent=1 // pred_region
      _
    $region21: #{tpu_custom_call.1} parent=1 // pred_fallthru
      _
    // Predicated region
    $region22: #{tpu_custom_call.1} parent=1 // pred_check
      _
    $region23: #{tpu_custom_call.1} parent=1 // pred_check_branch
      %37 = sbr.rel (0) target = $region25
    $region24: #{tpu_custom_call.1} parent=1 // pred_region
      %s39 = ssub.s32 1024, 1024
      %40 = vsyncadd [#allocation6], %s39
      %s41 = sshll.u32 [#allocation5], 4
      %s42 = int_to_ptr.vmem [resolvable:$true] %s41
      %47 = dma.hbm_to_vmem [thread:$0]  %s5, 1024, %s42, [#allocation6], 64, 64, 4
    $region25: #{tpu_custom_call.1} parent=1 // pred_fallthru
      _
    // Predicated region
    $region26: #{tpu_custom_call.1} parent=1 // pred_check
      _
    $region27: #{tpu_custom_call.1} parent=1 // pred_check_branch
      %49 = sbr.rel (0) target = $region29
    $region28: #{tpu_custom_call.1} parent=1 // pred_region
      _
    $region29: #{tpu_custom_call.1} parent=1 // pred_fallthru
      _
    // Predicated region
    $region30: #{tpu_custom_call.1} parent=1 // pred_check
      _
    $region31: #{tpu_custom_call.1} parent=1 // pred_check_branch
      %51 = sbr.rel (0) target = $region33
    $region32: #{tpu_custom_call.1} parent=1 // pred_region
      _
    $region33: #{tpu_custom_call.1} parent=1 // pred_fallthru
      _
    // Predicated region
    $region34: #{tpu_custom_call.1} parent=1 // pred_check
      _
    $region35: #{tpu_custom_call.1} parent=1 // pred_check_branch
      %53 = sbr.rel (0) target = $region37
    $region36: #{tpu_custom_call.1} parent=1 // pred_region
      %54 = dma.done [#allocation3], 4096
    $region37: #{tpu_custom_call.1} parent=1 // pred_fallthru
      _
    // Predicated region
    $region38: #{tpu_custom_call.1} parent=1 // pred_check
      _
    $region39: #{tpu_custom_call.1} parent=1 // pred_check_branch
      %56 = sbr.rel (0) target = $region41
    $region40: #{tpu_custom_call.1} parent=1 // pred_region
      %57 = dma.done [#allocation6], 1024
    $region41: #{tpu_custom_call.1} parent=1 // pred_fallthru
      _
    %v59 = vld [vmem:[%s0] sm:$0xff]
    %v60 = vld [vmem:[%s0 + $0x8] sm:$0xff]
    %v61 = vpack.c.bf16 %v60, %v59
    %v62 = vld [vmem:[%s1] sm:$0xf]
    %v63 = vld [vmem:[%s2] sm:$0x1]
    %v65 = vlaneseq
    %v66 = vshrl.u32 %v65, 7
    %v67 = vsub.s32 0, %v66
    %v68 = vrot.slane %v63, %v67
    %vm70 = vcmask 64512
    %v72 = vsel %vm70, %v61, 0
    %vm74 = vcmask 1043456
    %v76 = vsel %vm74, %v62, 0
    %78 = vmatprep.subr.bf16.mxu0 0
    %79 = vmatpush1.bf16.msra.mxu0 %v76
    %80 = vmatprep.subr.bf16.mxu0 0
    %81 = vmatpush1.bf16.msra.mxu0 0
    %82 = vmatprep.subr.bf16.mxu0 0
    %83 = vmatpush1.bf16.msra.mxu0 0
    %84 = vmatprep.subr.bf16.mxu0 0
    %85 = vmatpush1.bf16.msra.mxu0 0
    %86 = vmatprep.subr.bf16.mxu0 0
    %87 = vmatpush1.bf16.msra.mxu0 0
    %88 = vmatprep.subr.bf16.mxu0 0
    %89 = vmatpush1.bf16.msra.mxu0 0
    %90 = vmatprep.subr.bf16.mxu0 0
    %91 = vmatpush1.bf16.msra.mxu0 0
    %92 = vmatprep.subr.bf16.mxu0 0
    %93 = vmatpush1.bf16.msra.mxu0 0
    %94 = vmatprep.subr.bf16.mxu0 0
    %95 = vmatpush1.bf16.msra.mxu0 0
    %96 = vmatprep.subr.bf16.mxu0 0
    %97 = vmatpush1.bf16.msra.mxu0 0
    %98 = vmatprep.subr.bf16.mxu0 0
    %99 = vmatpush1.bf16.msra.mxu0 0
    %100 = vmatprep.subr.bf16.mxu0 0
    %101 = vmatpush1.bf16.msra.mxu0 0
    %102 = vmatprep.subr.bf16.mxu0 0
    %103 = vmatpush1.bf16.msra.mxu0 0
    %104 = vmatprep.subr.bf16.mxu0 0
    %105 = vmatpush1.bf16.msra.mxu0 0
    %106 = vmatprep.subr.bf16.mxu0 0
    %107 = vmatpush1.bf16.msra.mxu0 0
    %108 = vmatprep.subr.bf16.mxu0 0
    %109 = vmatpush1.bf16.msra.mxu0 0
    %110 = vmatprep.mubr.bf16.mxu0 0
    %111 = vmatmul.mubr.bf16.gmra.mrb[0].mxu0 %v72
    %v112 = vpop.f32.mrb[0].mxu0
    %v113 = vadd.f32 %v68, %v112
    %v114 = vpop.f32.mrb[0].mxu0
    %v115 = vpop.f32.mrb[0].mxu0
    %v116 = vadd.f32 %v68, %v115
    %v117 = vpop.f32.mrb[0].mxu0
    %118 = vdwg.mxu0
    %v119 = vmax.f32 %v113, 0.0
    %v120 = vmax.f32 %v116, 0.0
    %v121 = vpack.c.bf16 %v120, %v119
    %v122 = vld [vmem:[#allocation2] sm:$0xf]
    %v123 = vld [vmem:[#allocation2 + $0x4] sm:$0xf]
    %v124 = vld [vmem:[#allocation2 + $0x8] sm:$0xf]
    %v125 = vld [vmem:[#allocation2 + $0xc] sm:$0xf]
    %v126 = vld [vmem:[#allocation2 + $0x10] sm:$0xf]
    %v127 = vld [vmem:[#allocation2 + $0x14] sm:$0xf]
    %v128 = vld [vmem:[#allocation2 + $0x18] sm:$0xf]
    %v129 = vld [vmem:[#allocation2 + $0x1c] sm:$0xf]
    %v130 = vld [vmem:[#allocation2 + $0x20] sm:$0xf]
    %v131 = vld [vmem:[#allocation2 + $0x24] sm:$0xf]
    %v132 = vld [vmem:[#allocation2 + $0x28] sm:$0xf]
    %v133 = vld [vmem:[#allocation2 + $0x2c] sm:$0xf]
    %v134 = vld [vmem:[#allocation2 + $0x30] sm:$0xf]
    %v135 = vld [vmem:[#allocation2 + $0x34] sm:$0xf]
    %v136 = vld [vmem:[#allocation2 + $0x38] sm:$0xf]
    %v137 = vld [vmem:[#allocation2 + $0x3c] sm:$0xf]
    %v138 = vld [vmem:[%s4] sm:$0x1]
    %v140 = vlaneseq
    %v141 = vshrl.u32 %v140, 7
    %v142 = vsub.s32 0, %v141
    %v143 = vrot.slane %v138, %v142
    %v161 = vunpack.c.l.b16 %v122
    %v162 = vunpack.c.l.b16 %v123
    %v163 = vunpack.c.l.b16 %v124
    %v164 = vunpack.c.l.b16 %v125
    %v165 = vunpack.c.l.b16 %v126
    %v166 = vunpack.c.l.b16 %v127
    %v167 = vunpack.c.l.b16 %v128
    %v168 = vunpack.c.l.b16 %v129
    %v169 = vunpack.c.l.b16 %v130
    %v170 = vunpack.c.l.b16 %v131
    %v171 = vunpack.c.l.b16 %v132
    %v172 = vunpack.c.l.b16 %v133
    %v173 = vunpack.c.l.b16 %v134
    %v174 = vunpack.c.l.b16 %v135
    %v175 = vunpack.c.l.b16 %v136
    %v176 = vunpack.c.l.b16 %v137
    %v177 = vpack.c.b16 %v162, %v161
    %v178 = vpack.c.b16 %v164, %v163
    %v179 = vpack.c.b16 %v166, %v165
    %v180 = vpack.c.b16 %v168, %v167
    %v181 = vpack.c.b16 %v170, %v169
    %v182 = vpack.c.b16 %v172, %v171
    %v183 = vpack.c.b16 %v174, %v173
    %v184 = vpack.c.b16 %v176, %v175
    %193 = vmatprep.subr.bf16.mxu0 0
    %194 = vmatpush1.bf16.msra.mxu0 %v177
    %195 = vmatprep.subr.bf16.mxu0 0
    %196 = vmatpush1.bf16.msra.mxu0 %v178
    %197 = vmatprep.subr.bf16.mxu0 0
    %198 = vmatpush1.bf16.msra.mxu0 %v179
    %199 = vmatprep.subr.bf16.mxu0 0
    %200 = vmatpush1.bf16.msra.mxu0 %v180
    %201 = vmatprep.subr.bf16.mxu0 0
    %202 = vmatpush1.bf16.msra.mxu0 %v181
    %203 = vmatprep.subr.bf16.mxu0 0
    %204 = vmatpush1.bf16.msra.mxu0 %v182
    %205 = vmatprep.subr.bf16.mxu0 0
    %206 = vmatpush1.bf16.msra.mxu0 %v183
    %207 = vmatprep.subr.bf16.mxu0 0
    %208 = vmatpush1.bf16.msra.mxu0 %v184
    %209 = vmatprep.subr.bf16.mxu0 0
    %210 = vmatpush1.bf16.msra.mxu0 0
    %211 = vmatprep.subr.bf16.mxu0 0
    %212 = vmatpush1.bf16.msra.mxu0 0
    %213 = vmatprep.subr.bf16.mxu0 0
    %214 = vmatpush1.bf16.msra.mxu0 0
    %215 = vmatprep.subr.bf16.mxu0 0
    %216 = vmatpush1.bf16.msra.mxu0 0
    %217 = vmatprep.subr.bf16.mxu0 0
    %218 = vmatpush1.bf16.msra.mxu0 0
    %219 = vmatprep.subr.bf16.mxu0 0
    %220 = vmatpush1.bf16.msra.mxu0 0
    %221 = vmatprep.subr.bf16.mxu0 0
    %222 = vmatpush1.bf16.msra.mxu0 0
    %223 = vmatprep.subr.bf16.mxu0 0
    %224 = vmatpush1.bf16.msra.mxu0 0
    %225 = vmatprep.mubr.bf16.mxu0 0
    %226 = vmatmul.mubr.bf16.gmra.mrb[0].mxu0 %v121
    %v227 = vpop.f32.mrb[0].mxu0
    %v228 = vadd.f32 %v143, %v227
    %v229 = vpop.f32.mrb[0].mxu0
    %v230 = vpop.f32.mrb[0].mxu0
    %v231 = vadd.f32 %v143, %v230
    %v232 = vpop.f32.mrb[0].mxu0
    %233 = vdwg.mxu0
    %v234 = vmax.f32 %v228, 0.0
    %v235 = vmax.f32 %v231, 0.0
    %v236 = vpack.c.bf16 %v235, %v234
    %s237 = scalar_lea.vmem [#allocation2], 64
    %v238 = vld [vmem:[%s237] sm:$0xf]
    %v239 = vld [vmem:[%s237 + $0x4] sm:$0xf]
    %v240 = vld [vmem:[%s237 + $0x8] sm:$0xf]
    %v241 = vld [vmem:[%s237 + $0xc] sm:$0xf]
    %v242 = vld [vmem:[%s237 + $0x10] sm:$0xf]
    %v243 = vld [vmem:[%s237 + $0x14] sm:$0xf]
    %v244 = vld [vmem:[%s237 + $0x18] sm:$0xf]
    %v245 = vld [vmem:[%s237 + $0x1c] sm:$0xf]
    %v246 = vld [vmem:[%s237 + $0x20] sm:$0xf]
    %v247 = vld [vmem:[%s237 + $0x24] sm:$0xf]
    %v248 = vld [vmem:[%s237 + $0x28] sm:$0xf]
    %v249 = vld [vmem:[%s237 + $0x2c] sm:$0xf]
    %v250 = vld [vmem:[%s237 + $0x30] sm:$0xf]
    %v251 = vld [vmem:[%s237 + $0x34] sm:$0xf]
    %v252 = vld [vmem:[%s237 + $0x38] sm:$0xf]
    %v253 = vld [vmem:[%s237 + $0x3c] sm:$0xf]
    %s254 = scalar_lea.vmem %s4, 1
    %v255 = vld [vmem:[%s254] sm:$0x1]
    %v257 = vlaneseq
    %v258 = vshrl.u32 %v257, 7
    %v259 = vsub.s32 0, %v258
    %v260 = vrot.slane %v255, %v259
    %v278 = vunpack.c.l.b16 %v238
    %v279 = vunpack.c.l.b16 %v239
    %v280 = vunpack.c.l.b16 %v240
    %v281 = vunpack.c.l.b16 %v241
    %v282 = vunpack.c.l.b16 %v242
    %v283 = vunpack.c.l.b16 %v243
    %v284 = vunpack.c.l.b16 %v244
    %v285 = vunpack.c.l.b16 %v245
    %v286 = vunpack.c.l.b16 %v246
    %v287 = vunpack.c.l.b16 %v247
    %v288 = vunpack.c.l.b16 %v248
    %v289 = vunpack.c.l.b16 %v249
    %v290 = vunpack.c.l.b16 %v250
    %v291 = vunpack.c.l.b16 %v251
    %v292 = vunpack.c.l.b16 %v252
    %v293 = vunpack.c.l.b16 %v253
    %v294 = vpack.c.b16 %v279, %v278
    %v295 = vpack.c.b16 %v281, %v280
    %v296 = vpack.c.b16 %v283, %v282
    %v297 = vpack.c.b16 %v285, %v284
    %v298 = vpack.c.b16 %v287, %v286
    %v299 = vpack.c.b16 %v289, %v288
    %v300 = vpack.c.b16 %v291, %v290
    %v301 = vpack.c.b16 %v293, %v292
    %310 = vmatprep.subr.bf16.mxu0 0
    %311 = vmatpush1.bf16.msra.mxu0 %v294
    %312 = vmatprep.subr.bf16.mxu0 0
    %313 = vmatpush1.bf16.msra.mxu0 %v295
    %314 = vmatprep.subr.bf16.mxu0 0
    %315 = vmatpush1.bf16.msra.mxu0 %v296
    %316 = vmatprep.subr.bf16.mxu0 0
    %317 = vmatpush1.bf16.msra.mxu0 %v297
    %318 = vmatprep.subr.bf16.mxu0 0
    %319 = vmatpush1.bf16.msra.mxu0 %v298
    %320 = vmatprep.subr.bf16.mxu0 0
    %321 = vmatpush1.bf16.msra.mxu0 %v299
    %322 = vmatprep.subr.bf16.mxu0 0
    %323 = vmatpush1.bf16.msra.mxu0 %v300
    %324 = vmatprep.subr.bf16.mxu0 0
    %325 = vmatpush1.bf16.msra.mxu0 %v301
    %326 = vmatprep.subr.bf16.mxu0 0
    %327 = vmatpush1.bf16.msra.mxu0 0
    %328 = vmatprep.subr.bf16.mxu0 0
    %329 = vmatpush1.bf16.msra.mxu0 0
    %330 = vmatprep.subr.bf16.mxu0 0
    %331 = vmatpush1.bf16.msra.mxu0 0
    %332 = vmatprep.subr.bf16.mxu0 0
    %333 = vmatpush1.bf16.msra.mxu0 0
    %334 = vmatprep.subr.bf16.mxu0 0
    %335 = vmatpush1.bf16.msra.mxu0 0
    %336 = vmatprep.subr.bf16.mxu0 0
    %337 = vmatpush1.bf16.msra.mxu0 0
    %338 = vmatprep.subr.bf16.mxu0 0
    %339 = vmatpush1.bf16.msra.mxu0 0
    %340 = vmatprep.subr.bf16.mxu0 0
    %341 = vmatpush1.bf16.msra.mxu0 0
    %342 = vmatprep.mubr.bf16.mxu0 0
    %343 = vmatmul.mubr.bf16.gmra.mrb[0].mxu0 %v236
    %v344 = vpop.f32.mrb[0].mxu0
    %v345 = vadd.f32 %v260, %v344
    %v346 = vpop.f32.mrb[0].mxu0
    %v347 = vpop.f32.mrb[0].mxu0
    %v348 = vadd.f32 %v260, %v347
    %v349 = vpop.f32.mrb[0].mxu0
    %350 = vdwg.mxu0
    %v351 = vadd.f32 %v113, %v345
    %v352 = vadd.f32 %v116, %v348
    %v353 = vmax.f32 %v351, 0.0
    %v354 = vmax.f32 %v352, 0.0
    %v355 = vpack.c.bf16 %v354, %v353
    %s356 = scalar_lea.vmem [#allocation2], 128
    %v357 = vld [vmem:[%s356] sm:$0xf]
    %v358 = vld [vmem:[%s356 + $0x4] sm:$0xf]
    %v359 = vld [vmem:[%s356 + $0x8] sm:$0xf]
    %v360 = vld [vmem:[%s356 + $0xc] sm:$0xf]
    %v361 = vld [vmem:[%s356 + $0x10] sm:$0xf]
    %v362 = vld [vmem:[%s356 + $0x14] sm:$0xf]
    %v363 = vld [vmem:[%s356 + $0x18] sm:$0xf]
    %v364 = vld [vmem:[%s356 + $0x1c] sm:$0xf]
    %v365 = vld [vmem:[%s356 + $0x20] sm:$0xf]
    %v366 = vld [vmem:[%s356 + $0x24] sm:$0xf]
    %v367 = vld [vmem:[%s356 + $0x28] sm:$0xf]
    %v368 = vld [vmem:[%s356 + $0x2c] sm:$0xf]
    %v369 = vld [vmem:[%s356 + $0x30] sm:$0xf]
    %v370 = vld [vmem:[%s356 + $0x34] sm:$0xf]
    %v371 = vld [vmem:[%s356 + $0x38] sm:$0xf]
    %v372 = vld [vmem:[%s356 + $0x3c] sm:$0xf]
    %s373 = scalar_lea.vmem %s4, 2
    %v374 = vld [vmem:[%s373] sm:$0x1]
    %v376 = vlaneseq
    %v377 = vshrl.u32 %v376, 7
    %v378 = vsub.s32 0, %v377
    %v379 = vrot.slane %v374, %v378
    %v397 = vunpack.c.l.b16 %v357
    %v398 = vunpack.c.l.b16 %v358
    %v399 = vunpack.c.l.b16 %v359
    %v400 = vunpack.c.l.b16 %v360
    %v401 = vunpack.c.l.b16 %v361
    %v402 = vunpack.c.l.b16 %v362
    %v403 = vunpack.c.l.b16 %v363
    %v404 = vunpack.c.l.b16 %v364
    %v405 = vunpack.c.l.b16 %v365
    %v406 = vunpack.c.l.b16 %v366
    %v407 = vunpack.c.l.b16 %v367
    %v408 = vunpack.c.l.b16 %v368
    %v409 = vunpack.c.l.b16 %v369
    %v410 = vunpack.c.l.b16 %v370
    %v411 = vunpack.c.l.b16 %v371
    %v412 = vunpack.c.l.b16 %v372
    %v413 = vpack.c.b16 %v398, %v397
    %v414 = vpack.c.b16 %v400, %v399
    %v415 = vpack.c.b16 %v402, %v401
    %v416 = vpack.c.b16 %v404, %v403
    %v417 = vpack.c.b16 %v406, %v405
    %v418 = vpack.c.b16 %v408, %v407
    %v419 = vpack.c.b16 %v410, %v409
    %v420 = vpack.c.b16 %v412, %v411
    %429 = vmatprep.subr.bf16.mxu0 0
    %430 = vmatpush1.bf16.msra.mxu0 %v413
    %431 = vmatprep.subr.bf16.mxu0 0
    %432 = vmatpush1.bf16.msra.mxu0 %v414
    %433 = vmatprep.subr.bf16.mxu0 0
    %434 = vmatpush1.bf16.msra.mxu0 %v415
    %435 = vmatprep.subr.bf16.mxu0 0
    %436 = vmatpush1.bf16.msra.mxu0 %v416
    %437 = vmatprep.subr.bf16.mxu0 0
    %438 = vmatpush1.bf16.msra.mxu0 %v417
    %439 = vmatprep.subr.bf16.mxu0 0
    %440 = vmatpush1.bf16.msra.mxu0 %v418
    %441 = vmatprep.subr.bf16.mxu0 0
    %442 = vmatpush1.bf16.msra.mxu0 %v419
    %443 = vmatprep.subr.bf16.mxu0 0
    %444 = vmatpush1.bf16.msra.mxu0 %v420
    %445 = vmatprep.subr.bf16.mxu0 0
    %446 = vmatpush1.bf16.msra.mxu0 0
    %447 = vmatprep.subr.bf16.mxu0 0
    %448 = vmatpush1.bf16.msra.mxu0 0
    %449 = vmatprep.subr.bf16.mxu0 0
    %450 = vmatpush1.bf16.msra.mxu0 0
    %451 = vmatprep.subr.bf16.mxu0 0
    %452 = vmatpush1.bf16.msra.mxu0 0
    %453 = vmatprep.subr.bf16.mxu0 0
    %454 = vmatpush1.bf16.msra.mxu0 0
    %455 = vmatprep.subr.bf16.mxu0 0
    %456 = vmatpush1.bf16.msra.mxu0 0
    %457 = vmatprep.subr.bf16.mxu0 0
    %458 = vmatpush1.bf16.msra.mxu0 0
    %459 = vmatprep.subr.bf16.mxu0 0
    %460 = vmatpush1.bf16.msra.mxu0 0
    %461 = vmatprep.mubr.bf16.mxu0 0
    %462 = vmatmul.mubr.bf16.gmra.mrb[0].mxu0 %v355
    %v463 = vpop.f32.mrb[0].mxu0
    %v464 = vadd.f32 %v379, %v463
    %v465 = vpop.f32.mrb[0].mxu0
    %v466 = vpop.f32.mrb[0].mxu0
    %v467 = vadd.f32 %v379, %v466
    %v468 = vpop.f32.mrb[0].mxu0
    %469 = vdwg.mxu0
    %v470 = vmax.f32 %v464, 0.0
    %v471 = vmax.f32 %v467, 0.0
    %v472 = vpack.c.bf16 %v471, %v470
    %s473 = scalar_lea.vmem [#allocation2], 192
    %v474 = vld [vmem:[%s473] sm:$0xf]
    %v475 = vld [vmem:[%s473 + $0x4] sm:$0xf]
    %v476 = vld [vmem:[%s473 + $0x8] sm:$0xf]
    %v477 = vld [vmem:[%s473 + $0xc] sm:$0xf]
    %v478 = vld [vmem:[%s473 + $0x10] sm:$0xf]
    %v479 = vld [vmem:[%s473 + $0x14] sm:$0xf]
    %v480 = vld [vmem:[%s473 + $0x18] sm:$0xf]
    %v481 = vld [vmem:[%s473 + $0x1c] sm:$0xf]
    %v482 = vld [vmem:[%s473 + $0x20] sm:$0xf]
    %v483 = vld [vmem:[%s473 + $0x24] sm:$0xf]
    %v484 = vld [vmem:[%s473 + $0x28] sm:$0xf]
    %v485 = vld [vmem:[%s473 + $0x2c] sm:$0xf]
    %v486 = vld [vmem:[%s473 + $0x30] sm:$0xf]
    %v487 = vld [vmem:[%s473 + $0x34] sm:$0xf]
    %v488 = vld [vmem:[%s473 + $0x38] sm:$0xf]
    %v489 = vld [vmem:[%s473 + $0x3c] sm:$0xf]
    %s490 = scalar_lea.vmem %s4, 3
    %v491 = vld [vmem:[%s490] sm:$0x1]
    %v493 = vlaneseq
    %v494 = vshrl.u32 %v493, 7
    %v495 = vsub.s32 0, %v494
    %v496 = vrot.slane %v491, %v495
    %v514 = vunpack.c.l.b16 %v474
    %v515 = vunpack.c.l.b16 %v475
    %v516 = vunpack.c.l.b16 %v476
    %v517 = vunpack.c.l.b16 %v477
    %v518 = vunpack.c.l.b16 %v478
    %v519 = vunpack.c.l.b16 %v479
    %v520 = vunpack.c.l.b16 %v480
    %v521 = vunpack.c.l.b16 %v481
    %v522 = vunpack.c.l.b16 %v482
    %v523 = vunpack.c.l.b16 %v483
    %v524 = vunpack.c.l.b16 %v484
    %v525 = vunpack.c.l.b16 %v485
    %v526 = vunpack.c.l.b16 %v486
    %v527 = vunpack.c.l.b16 %v487
    %v528 = vunpack.c.l.b16 %v488
    %v529 = vunpack.c.l.b16 %v489
    %v530 = vpack.c.b16 %v515, %v514
    %v531 = vpack.c.b16 %v517, %v516
    %v532 = vpack.c.b16 %v519, %v518
    %v533 = vpack.c.b16 %v521, %v520
    %v534 = vpack.c.b16 %v523, %v522
    %v535 = vpack.c.b16 %v525, %v524
    %v536 = vpack.c.b16 %v527, %v526
    %v537 = vpack.c.b16 %v529, %v528
    %546 = vmatprep.subr.bf16.mxu0 0
    %547 = vmatpush1.bf16.msra.mxu0 %v530
    %548 = vmatprep.subr.bf16.mxu0 0
    %549 = vmatpush1.bf16.msra.mxu0 %v531
    %550 = vmatprep.subr.bf16.mxu0 0
    %551 = vmatpush1.bf16.msra.mxu0 %v532
    %552 = vmatprep.subr.bf16.mxu0 0
    %553 = vmatpush1.bf16.msra.mxu0 %v533
    %554 = vmatprep.subr.bf16.mxu0 0
    %555 = vmatpush1.bf16.msra.mxu0 %v534
    %556 = vmatprep.subr.bf16.mxu0 0
    %557 = vmatpush1.bf16.msra.mxu0 %v535
    %558 = vmatprep.subr.bf16.mxu0 0
    %559 = vmatpush1.bf16.msra.mxu0 %v536
    %560 = vmatprep.subr.bf16.mxu0 0
    %561 = vmatpush1.bf16.msra.mxu0 %v537
    %562 = vmatprep.subr.bf16.mxu0 0
    %563 = vmatpush1.bf16.msra.mxu0 0
    %564 = vmatprep.subr.bf16.mxu0 0
    %565 = vmatpush1.bf16.msra.mxu0 0
    %566 = vmatprep.subr.bf16.mxu0 0
    %567 = vmatpush1.bf16.msra.mxu0 0
    %568 = vmatprep.subr.bf16.mxu0 0
    %569 = vmatpush1.bf16.msra.mxu0 0
    %570 = vmatprep.subr.bf16.mxu0 0
    %571 = vmatpush1.bf16.msra.mxu0 0
    %572 = vmatprep.subr.bf16.mxu0 0
    %573 = vmatpush1.bf16.msra.mxu0 0
    %574 = vmatprep.subr.bf16.mxu0 0
    %575 = vmatpush1.bf16.msra.mxu0 0
    %576 = vmatprep.subr.bf16.mxu0 0
    %577 = vmatpush1.bf16.msra.mxu0 0
    %578 = vmatprep.mubr.bf16.mxu0 0
    %579 = vmatmul.mubr.bf16.gmra.mrb[0].mxu0 %v472
    %v580 = vpop.f32.mrb[0].mxu0
    %v581 = vadd.f32 %v496, %v580
    %v582 = vpop.f32.mrb[0].mxu0
    %v583 = vpop.f32.mrb[0].mxu0
    %v584 = vadd.f32 %v496, %v583
    %v585 = vpop.f32.mrb[0].mxu0
    %586 = vdwg.mxu0
    %v587 = vadd.f32 %v351, %v581
    %v588 = vadd.f32 %v352, %v584
    %v589 = vpack.c.bf16 %v588, %v587
    %v590 = vld [vmem:[#allocation5] sm:$0xf]
    %v591 = vld [vmem:[#allocation5 + $0x4] sm:$0xf]
    %v592 = vld [vmem:[#allocation5 + $0x8] sm:$0xf]
    %v593 = vld [vmem:[#allocation5 + $0xc] sm:$0xf]
    %v594 = vld [vmem:[#allocation5 + $0x10] sm:$0xf]
    %v595 = vld [vmem:[#allocation5 + $0x14] sm:$0xf]
    %v596 = vld [vmem:[#allocation5 + $0x18] sm:$0xf]
    %v597 = vld [vmem:[#allocation5 + $0x1c] sm:$0xf]
    %v598 = vld [vmem:[#allocation5 + $0x20] sm:$0xf]
    %v599 = vld [vmem:[#allocation5 + $0x24] sm:$0xf]
    %v600 = vld [vmem:[#allocation5 + $0x28] sm:$0xf]
    %v601 = vld [vmem:[#allocation5 + $0x2c] sm:$0xf]
    %v602 = vld [vmem:[#allocation5 + $0x30] sm:$0xf]
    %v603 = vld [vmem:[#allocation5 + $0x34] sm:$0xf]
    %v604 = vld [vmem:[#allocation5 + $0x38] sm:$0xf]
    %v605 = vld [vmem:[#allocation5 + $0x3c] sm:$0xf]
    %v606 = vld [vmem:[%s6] sm:$0x1]
    %v608 = vlaneseq
    %v609 = vshrl.u32 %v608, 7
    %v610 = vsub.s32 0, %v609
    %v611 = vrot.slane %v606, %v610
    %v629 = vunpack.c.l.b16 %v590
    %v630 = vunpack.c.l.b16 %v591
    %v631 = vunpack.c.l.b16 %v592
    %v632 = vunpack.c.l.b16 %v593
    %v633 = vunpack.c.l.b16 %v594
    %v634 = vunpack.c.l.b16 %v595
    %v635 = vunpack.c.l.b16 %v596
    %v636 = vunpack.c.l.b16 %v597
    %v637 = vunpack.c.l.b16 %v598
    %v638 = vunpack.c.l.b16 %v599
    %v639 = vunpack.c.l.b16 %v600
    %v640 = vunpack.c.l.b16 %v601
    %v641 = vunpack.c.l.b16 %v602
    %v642 = vunpack.c.l.b16 %v603
    %v643 = vunpack.c.l.b16 %v604
    %v644 = vunpack.c.l.b16 %v605
    %v645 = vpack.c.b16 %v630, %v629
    %v646 = vpack.c.b16 %v632, %v631
    %v647 = vpack.c.b16 %v634, %v633
    %v648 = vpack.c.b16 %v636, %v635
    %v649 = vpack.c.b16 %v638, %v637
    %v650 = vpack.c.b16 %v640, %v639
    %v651 = vpack.c.b16 %v642, %v641
    %v652 = vpack.c.b16 %v644, %v643
    %661 = vmatprep.subr.bf16.mxu0 0
    %662 = vmatpush1.bf16.msra.mxu0 %v645
    %663 = vmatprep.subr.bf16.mxu0 0
    %664 = vmatpush1.bf16.msra.mxu0 %v646
    %665 = vmatprep.subr.bf16.mxu0 0
    %666 = vmatpush1.bf16.msra.mxu0 %v647
    %667 = vmatprep.subr.bf16.mxu0 0
    %668 = vmatpush1.bf16.msra.mxu0 %v648
    %669 = vmatprep.subr.bf16.mxu0 0
    %670 = vmatpush1.bf16.msra.mxu0 %v649
    %671 = vmatprep.subr.bf16.mxu0 0
    %672 = vmatpush1.bf16.msra.mxu0 %v650
    %673 = vmatprep.subr.bf16.mxu0 0
    %674 = vmatpush1.bf16.msra.mxu0 %v651
    %675 = vmatprep.subr.bf16.mxu0 0
    %676 = vmatpush1.bf16.msra.mxu0 %v652
    %677 = vmatprep.subr.bf16.mxu0 0
    %678 = vmatpush1.bf16.msra.mxu0 0
    %679 = vmatprep.subr.bf16.mxu0 0
    %680 = vmatpush1.bf16.msra.mxu0 0
    %681 = vmatprep.subr.bf16.mxu0 0
    %682 = vmatpush1.bf16.msra.mxu0 0
    %683 = vmatprep.subr.bf16.mxu0 0
    %684 = vmatpush1.bf16.msra.mxu0 0
    %685 = vmatprep.subr.bf16.mxu0 0
    %686 = vmatpush1.bf16.msra.mxu0 0
    %687 = vmatprep.subr.bf16.mxu0 0
    %688 = vmatpush1.bf16.msra.mxu0 0
    %689 = vmatprep.subr.bf16.mxu0 0
    %690 = vmatpush1.bf16.msra.mxu0 0
    %691 = vmatprep.subr.bf16.mxu0 0
    %692 = vmatpush1.bf16.msra.mxu0 0
    %693 = vmatprep.mubr.bf16.mxu0 0
    %694 = vmatmul.mubr.bf16.gmra.mrb[0].mxu0 %v589
    %v695 = vpop.f32.mrb[0].mxu0
    %v696 = vadd.f32 %v611, %v695
    %v697 = vpop.f32.mrb[0].mxu0
    %v698 = vpop.f32.mrb[0].mxu0
    %v699 = vadd.f32 %v611, %v698
    %v700 = vpop.f32.mrb[0].mxu0
    %701 = vdwg.mxu0
    %v702 = vld [vmem:[%s7] sm:$0xff]
    %v703 = vand.u32 2147483647, %v696
    %v704 = vand.u32 2147483647, %v699
    %vm705 = vcmp.ge.f32.partialorder %v696, 0.0
    %vm706 = vcmp.ge.f32.partialorder %v699, 0.0
    %v707 = vsel %vm705, 1.0, -1.0
    %v708 = vsel %vm706, 1.0, -1.0
    %v709 = vlaneseq
    %v710 = vshrl.u32 %v709, 7
    %v711 = vsub.s32 0, %v710
    %v712 = vrot.slane %v702, %v711
    %v713 = vmul.f32 %v712, %v696
    %v714 = vmul.f32 %v712, %v699
    %v715 = vmul.f32 %v703, 0.70710677
    %v716 = vmul.f32 %v704, 0.70710677
    %v717 = vmul.f32 %v715, 0.5
    %v718 = vmul.f32 %v716, 0.5
    %v719 = vadd.f32 %v717, 1.0
    %v720 = vadd.f32 %v718, 1.0
    %v721 = vrcp.pop %v719
    %v722 = vrcp.pop %v720
    %v723 = vmul.f32 %v721, 0.17087276
    %v724 = vmul.f32 %v722, 0.17087276
    %v725 = vadd.f32 %v723, -0.82215226
    %v726 = vadd.f32 %v724, -0.82215226
    %v727 = vmul.f32 %v721, %v725
    %v728 = vmul.f32 %v722, %v726
    %v729 = vadd.f32 %v727, 1.4885159
    %v730 = vadd.f32 %v728, 1.4885159
    %v731 = vmul.f32 %v721, %v729
    %v732 = vmul.f32 %v722, %v730
    %v733 = vadd.f32 %v731, -1.135204
    %v734 = vadd.f32 %v732, -1.135204
    %v735 = vmul.f32 %v721, %v733
    %v736 = vmul.f32 %v722, %v734
    %v737 = vadd.f32 %v735, 0.27886808
    %v738 = vadd.f32 %v736, 0.27886808
    %v739 = vmul.f32 %v721, %v737
    %v740 = vmul.f32 %v722, %v738
    %v741 = vadd.f32 %v739, -0.18628806
    %v742 = vadd.f32 %v740, -0.18628806
    %v743 = vmul.f32 %v721, %v741
    %v744 = vmul.f32 %v722, %v742
    %v745 = vadd.f32 %v743, 0.09678418
    %v746 = vadd.f32 %v744, 0.09678418
    %v747 = vmul.f32 %v721, %v745
    %v748 = vmul.f32 %v722, %v746
    %v749 = vadd.f32 %v747, 0.37409195
    %v750 = vadd.f32 %v748, 0.37409195
    %v751 = vmul.f32 %v721, %v749
    %v752 = vmul.f32 %v722, %v750
    %v753 = vadd.f32 %v751, 1.0000237
    %v754 = vadd.f32 %v752, 1.0000237
    %v755 = vmul.f32 %v721, %v753
    %v756 = vmul.f32 %v722, %v754
    %v757 = vadd.f32 %v755, -1.2655122
    %v758 = vadd.f32 %v756, -1.2655122
    %v759 = vlog2.pop %v721
    %v760 = vmul.f32 %v759, 0.6931472
    %v761 = vlog2.pop %v722
    %v762 = vmul.f32 %v761, 0.6931472
    %v763 = vmul.f32 %v715, %v715
    %v764 = vmul.f32 %v716, %v716
    %v765 = vsub.f32 %v757, %v763
    %v766 = vsub.f32 %v758, %v764
    %v767 = vadd.f32 %v760, %v765
    %v768 = vadd.f32 %v762, %v766
    %v769 = vsub.f32 0.0, %v702
    %v770 = vlaneseq
    %v771 = vshrl.u32 %v770, 7
    %v772 = vsub.s32 3, %v771
    %v773 = vrot.slane %v769, %v772
    %v774 = vmul.f32 %v773, %v767
    %v775 = vmul.f32 %v773, %v768
    %v776 = vmul.f32 %v774, 1.442695
    %v777 = vpow.pop %v776
    %v778 = vmul.f32 %v775, 1.442695
    %v779 = vpow.pop %v778
    %v780 = vsub.f32 %v777, 1.0
    %v781 = vsub.f32 %v779, 1.0
    %v782 = vlaneseq
    %v783 = vshrl.u32 %v782, 7
    %v784 = vsub.s32 4, %v783
    %v785 = vrot.slane %v702, %v784
    %v786 = vmul.f32 %v780, %v785
    %v787 = vmul.f32 %v781, %v785
    %v788 = vmul.f32 %v786, %v707
    %v789 = vmul.f32 %v787, %v708
    %v790 = vlaneseq
    %v791 = vshrl.u32 %v790, 7
    %v792 = vsub.s32 1, %v791
    %v793 = vrot.slane %v702, %v792
    %v794 = vmul.f32 %v793, %v788
    %v795 = vmul.f32 %v793, %v789
    %v796 = vadd.f32 %v713, %v794
    %v797 = vadd.f32 %v714, %v795
    %v798 = vlaneseq
    %v799 = vshrl.u32 %v798, 7
    %v800 = vsub.s32 5, %v799
    %v801 = vrot.slane %v702, %v800
    %v802 = vmul.f32 %v801, %v703
    %v803 = vmul.f32 %v801, %v704
    %v804 = vadd.f32 %v802, 1.0
    %v805 = vadd.f32 %v803, 1.0
    %v806 = vlog2.pop %v804
    %v807 = vmul.f32 %v806, 0.6931472
    %v808 = vlog2.pop %v805
    %v809 = vmul.f32 %v808, 0.6931472
    %v810 = vlaneseq
    %v811 = vshrl.u32 %v810, 7
    %v812 = vsub.s32 6, %v811
    %v813 = vrot.slane %v702, %v812
    %v814 = vmul.f32 %v813, %v807
    %v815 = vmul.f32 %v813, %v809
    %v816 = vmul.f32 %v814, 1.442695
    %v817 = vpow.pop %v816
    %v818 = vmul.f32 %v815, 1.442695
    %v819 = vpow.pop %v818
    %v820 = vmax.f32 %v817, 1e-06
    %v821 = vmax.f32 %v819, 1e-06
    %v822 = vsub.f32 1.0, %v820
    %v823 = vsub.f32 1.0, %v821
    %v824 = vsub.f32 1.0, %v822
    %v825 = vsub.f32 1.0, %v823
    %v826 = vadd.f32 %v822, 1.0
    %v827 = vadd.f32 %v823, 1.0
    %v828 = vmul.f32 %v824, %v826
    %v829 = vmul.f32 %v825, %v827
    %v830 = vlog2.pop %v828
    %v831 = vmul.f32 %v830, 0.6931472
    %v832 = vlog2.pop %v829
    %v833 = vmul.f32 %v832, 0.6931472
    %v834 = vsub.f32 0.0, %v831
    %v835 = vsub.f32 0.0, %v833
    %v836 = vsub.f32 %v834, 2.5
    %v837 = vsub.f32 %v835, 2.5
    %v838 = vmul.f32 %v836, 2.8102264e-08
    %v839 = vmul.f32 %v837, 2.8102264e-08
    %v840 = vadd.f32 %v838, 3.4327394e-07
    %v841 = vadd.f32 %v839, 3.4327394e-07
    %v842 = vmul.f32 %v840, %v836
    %v843 = vmul.f32 %v841, %v837
    %v844 = vadd.f32 %v842, -3.5233877e-06
    %v845 = vadd.f32 %v843, -3.5233877e-06
    %v846 = vmul.f32 %v844, %v836
    %v847 = vmul.f32 %v845, %v837
    %v848 = vadd.f32 %v846, -4.3915065e-06
    %v849 = vadd.f32 %v847, -4.3915065e-06
    %v850 = vmul.f32 %v848, %v836
    %v851 = vmul.f32 %v849, %v837
    %v852 = vadd.f32 %v850, 0.00021858087
    %v853 = vadd.f32 %v851, 0.00021858087
    %v854 = vmul.f32 %v852, %v836
    %v855 = vmul.f32 %v853, %v837
    %v856 = vadd.f32 %v854, -0.001253725
    %v857 = vadd.f32 %v855, -0.001253725
    %v858 = vmul.f32 %v856, %v836
    %v859 = vmul.f32 %v857, %v837
    %v860 = vadd.f32 %v858, -0.0041776816
    %v861 = vadd.f32 %v859, -0.0041776816
    %v862 = vmul.f32 %v860, %v836
    %v863 = vmul.f32 %v861, %v837
    %v864 = vadd.f32 %v862, 0.24664073
    %v865 = vadd.f32 %v863, 0.24664073
    %v866 = vmul.f32 %v864, %v836
    %v867 = vmul.f32 %v865, %v837
    %v868 = vadd.f32 %v866, 1.5014094
    %v869 = vadd.f32 %v867, 1.5014094
    %v870 = vrsqrt.pop %v834
    %v871 = vmul.f32 %v834, %v870
    %vm872 = vcmp.eq.f32.partialorder %v834, inf
    %v873 = vsel %vm872, %v834, %v871
    %vm874 = vcmp.eq.f32.partialorder %v834, 0.0
    %v875 = vand.u32 %v834, 2147483648
    %v876 = vsel %vm874, %v875, %v873
    %v877 = vrsqrt.pop %v835
    %v878 = vmul.f32 %v835, %v877
    %vm879 = vcmp.eq.f32.partialorder %v835, inf
    %v880 = vsel %vm879, %v835, %v878
    %vm881 = vcmp.eq.f32.partialorder %v835, 0.0
    %v882 = vand.u32 %v835, 2147483648
    %v883 = vsel %vm881, %v882, %v880
    %v884 = vsub.f32 %v876, 3.0
    %v885 = vsub.f32 %v883, 3.0
    %v886 = vmul.f32 %v884, -0.00020021426
    %v887 = vmul.f32 %v885, -0.00020021426
    %v888 = vadd.f32 %v886, 0.00010095056
    %v889 = vadd.f32 %v887, 0.00010095056
    %v890 = vmul.f32 %v888, %v884
    %v891 = vmul.f32 %v889, %v885
    %v892 = vadd.f32 %v890, 0.0013493432
    %v893 = vadd.f32 %v891, 0.0013493432
    %v894 = vmul.f32 %v892, %v884
    %v895 = vmul.f32 %v893, %v885
    %v896 = vadd.f32 %v894, -0.0036734284
    %v897 = vadd.f32 %v895, -0.0036734284
    %v898 = vmul.f32 %v896, %v884
    %v899 = vmul.f32 %v897, %v885
    %v900 = vadd.f32 %v898, 0.0057395077
    %v901 = vadd.f32 %v899, 0.0057395077
    %v902 = vmul.f32 %v900, %v884
    %v903 = vmul.f32 %v901, %v885
    %v904 = vadd.f32 %v902, -0.0076224613
    %v905 = vadd.f32 %v903, -0.0076224613
    %v906 = vmul.f32 %v904, %v884
    %v907 = vmul.f32 %v905, %v885
    %v908 = vadd.f32 %v906, 0.0094388705
    %v909 = vadd.f32 %v907, 0.0094388705
    %v910 = vmul.f32 %v908, %v884
    %v911 = vmul.f32 %v909, %v885
    %v912 = vadd.f32 %v910, 1.001674
    %v913 = vadd.f32 %v911, 1.001674
    %v914 = vmul.f32 %v912, %v884
    %v915 = vmul.f32 %v913, %v885
    %v916 = vadd.f32 %v914, 2.8329768
    %v917 = vadd.f32 %v915, 2.8329768
    %vm918 = vcmp.lt.f32.partialorder %v834, 5.0
    %vm919 = vcmp.lt.f32.partialorder %v835, 5.0
    %v920 = vsel %vm918, %v868, %v916
    %v921 = vsel %vm919, %v869, %v917
    %v922 = vmul.f32 %v920, %v822
    %v923 = vmul.f32 %v921, %v823
    %v924 = vlaneseq
    %v925 = vshrl.u32 %v924, 7
    %v926 = vsub.s32 7, %v925
    %v927 = vrot.slane %v702, %v926
    %v928 = vmul.f32 %v927, %v807
    %v929 = vmul.f32 %v927, %v809
    %v930 = vadd.f32 %v928, -0.4515827
    %v931 = vadd.f32 %v929, -0.4515827
    %v932 = vmax.f32 %v930, 1e-30
    %v933 = vmax.f32 %v931, 1e-30
    %v934 = vlog2.pop %v932
    %v935 = vmul.f32 %v934, 0.6931472
    %v936 = vlog2.pop %v933
    %v937 = vmul.f32 %v936, 0.6931472
    %v938 = vsub.f32 %v932, %v935
    %v939 = vsub.f32 %v933, %v937
    %v940 = vrsqrt.pop %v938
    %v941 = vmul.f32 %v938, %v940
    %vm942 = vcmp.eq.f32.partialorder %v938, inf
    %v943 = vsel %vm942, %v938, %v941
    %vm944 = vcmp.eq.f32.partialorder %v938, 0.0
    %v945 = vand.u32 %v938, 2147483648
    %v946 = vsel %vm944, %v945, %v943
    %v947 = vrsqrt.pop %v939
    %v948 = vmul.f32 %v939, %v947
    %vm949 = vcmp.eq.f32.partialorder %v939, inf
    %v950 = vsel %vm949, %v939, %v948
    %vm951 = vcmp.eq.f32.partialorder %v939, 0.0
    %v952 = vand.u32 %v939, 2147483648
    %v953 = vsel %vm951, %v952, %v950
    %v954 = vmul.f32 %v946, 0.70710677
    %v955 = vmul.f32 %v953, 0.70710677
    %vm956 = vcmp.gt.f32.partialorder %v817, 1e-06
    %vm957 = vcmp.gt.f32.partialorder %v819, 1e-06
    %v958 = vsel %vm956, %v922, %v954
    %v959 = vsel %vm957, %v923, %v955
    %v960 = vmul.f32 %v958, 1.4142135
    %v961 = vmul.f32 %v959, 1.4142135
    %v962 = vmul.f32 %v960, %v707
    %v963 = vmul.f32 %v961, %v708
    %v964 = vlaneseq
    %v965 = vshrl.u32 %v964, 7
    %v966 = vsub.s32 2, %v965
    %v967 = vrot.slane %v702, %v966
    %v968 = vmul.f32 %v967, %v962
    %v969 = vmul.f32 %v967, %v963
    %v970 = vadd.f32 %v796, %v968
    %v971 = vadd.f32 %v797, %v969
    %972 = vst [vmem:[#allocation7] sm:$0xff] %v970
    %973 = vst [vmem:[#allocation7 + $0x8] sm:$0xff] %v971
    // Predicated region
    $region42: #{tpu_custom_call.1} parent=1 // pred_check
      _
    $region43: #{tpu_custom_call.1} parent=1 // pred_check_branch
      %975 = sbr.rel (0) target = $region45
    $region44: #{tpu_custom_call.1} parent=1 // pred_region
      %s977 = ssub.s32 256, 256
      %978 = vsyncadd [#allocation4], %s977
      %s979 = sshll.u32 [#allocation7], 4
      %s980 = int_to_ptr.vmem [resolvable:$true] %s979
      %985 = dma.vmem_to_hbm [thread:$0]  %s980, 256, %s8, [#allocation4], 128, 128, 8
    $region45: #{tpu_custom_call.1} parent=1 // pred_fallthru
      _
    // Predicated region
    $region46: #{tpu_custom_call.1} parent=1 // pred_check
      _
    $region47: #{tpu_custom_call.1} parent=1 // pred_check_branch
      %987 = sbr.rel (0) target = $region49
    $region48: #{tpu_custom_call.1} parent=1 // pred_region
      %988 = dma.done [#allocation4], 256
    $region49: #{tpu_custom_call.1} parent=1 // pred_fallthru
      _
    %989 = vsyncpa [#allocation3], 1
    %990 = vsyncpa [#allocation6], 1
    %991 = vsyncpa [#allocation4], 1

// kernel: tpu_custom_call.1
$region0: #{tpu_custom_call.1}
  #allocation0 [shape = 'u32[]', space=smem, size = 0x4, offset = 0x4, fixed_abs, tag = 'smem constant byte address 0x4 - core index']
  #allocation1 [shape = 'u32[144,128]{1,0:T(1,128)}', space=vmem, size = 0x12000, scoped, tag = 'internal scratch']
  %s0 = inlined_call_operand.vmem [shape: f32[16,8], index: 0, kind: input, shape index: {}]
  %s1 = inlined_call_operand.vmem [shape: bf16[8,128], index: 1, kind: input, shape index: {}]
  %s2 = inlined_call_operand.vmem [shape: f32[1,128], index: 2, kind: input, shape index: {}]
  %s3 = inlined_call_operand.hbm [shape: bf16[2,2,128,128], index: 3, kind: input, shape index: {}]
  %s4 = inlined_call_operand.vmem [shape: f32[2,2,1,128], index: 4, kind: input, shape index: {}]
  %s5 = inlined_call_operand.hbm [shape: bf16[128,128], index: 5, kind: input, shape index: {}]
  %s6 = inlined_call_operand.vmem [shape: f32[1,128], index: 6, kind: input, shape index: {}]
  %s7 = inlined_call_operand.vmem [shape: f32[8,128], index: 7, kind: input, shape index: {}]
  %s8 = inlined_call_operand.hbm [shape: f32[16,128], index: 8, kind: output, shape index: {}]
  %s9 = sld [smem:[#allocation0]]
  $region50: #{tpu_custom_call.1} parent=0
    _
  %s11 = ssub.s32 1, %s9
  %s12 = scalar_select 0, %s11, %s9
  $region1: #{tpu_custom_call.1} parent=0
    #allocation2 [shape = 'u8[131072]{0}', space=vmem, size = 0x20000, scoped, tag = 'input window, operand 3, single buffered']
    #allocation3 [shape = 's32[1]{0}', space=sflag, size = 0x4, scoped, tag = 'scoped memory for tpu_custom_call.1']
    #allocation4 [shape = 's32[1]{0}', space=sflag, size = 0x4, scoped, tag = 'scoped memory for tpu_custom_call.1']
    #allocation5 [shape = 'u8[32768]{0}', space=vmem, size = 0x8000, scoped, tag = 'input window, operand 5, single buffered']
    #allocation6 [shape = 's32[1]{0}', space=sflag, size = 0x4, scoped, tag = 'scoped memory for tpu_custom_call.1']
    #allocation7 [shape = 'u8[8192]{0}', space=vmem, size = 0x2000, scoped, tag = 'output window, operand 0, single buffered']
    %13 = vsyncpa [#allocation3], 0
    %14 = vsyncpa [#allocation6], 0
    %15 = vsyncpa [#allocation4], 0
    // Predicated region
    $region2: #{tpu_custom_call.1} parent=1 // pred_check
      _
    $region3: #{tpu_custom_call.1} parent=1 // pred_check_branch
      %17 = sbr.rel (0) target = $region5
    $region4: #{tpu_custom_call.1} parent=1 // pred_region
      _
    $region5: #{tpu_custom_call.1} parent=1 // pred_fallthru
      _
    // Predicated region
    $region6: #{tpu_custom_call.1} parent=1 // pred_check
      _
    $region7: #{tpu_custom_call.1} parent=1 // pred_check_branch
      %19 = sbr.rel (0) target = $region9
    $region8: #{tpu_custom_call.1} parent=1 // pred_region
      _
    $region9: #{tpu_custom_call.1} parent=1 // pred_fallthru
      _
    // Predicated region
    $region10: #{tpu_custom_call.1} parent=1 // pred_check
      _
    $region11: #{tpu_custom_call.1} parent=1 // pred_check_branch
      %21 = sbr.rel (0) target = $region13
    $region12: #{tpu_custom_call.1} parent=1 // pred_region
      _
    $region13: #{tpu_custom_call.1} parent=1 // pred_fallthru
      _
    // Predicated region
    $region14: #{tpu_custom_call.1} parent=1 // pred_check
      _
    $region15: #{tpu_custom_call.1} parent=1 // pred_check_branch
      %23 = sbr.rel (0) target = $region17
    $region16: #{tpu_custom_call.1} parent=1 // pred_region
      %s25 = ssub.s32 4096, 4096
      %26 = vsyncadd [#allocation3], %s25
      %s27 = sshll.u32 [#allocation2], 4
      %s28 = int_to_ptr.vmem [resolvable:$true] %s27
      %33 = dma.hbm_to_vmem [thread:$0]  %s3, 4096, %s28, [#allocation3], 64, 64, 4
    $region17: #{tpu_custom_call.1} parent=1 // pred_fallthru
      _
    // Predicated region
    $region18: #{tpu_custom_call.1} parent=1 // pred_check
      _
    $region19: #{tpu_custom_call.1} parent=1 // pred_check_branch
      %35 = sbr.rel (0) target = $region21
    $region20: #{tpu_custom_call.1} parent=1 // pred_region
      _
    $region21: #{tpu_custom_call.1} parent=1 // pred_fallthru
      _
    // Predicated region
    $region22: #{tpu_custom_call.1} parent=1 // pred_check
      _
    $region23: #{tpu_custom_call.1} parent=1 // pred_check_branch
      %37 = sbr.rel (0) target = $region25
    $region24: #{tpu_custom_call.1} parent=1 // pred_region
      %s39 = ssub.s32 1024, 1024
      %40 = vsyncadd [#allocation6], %s39
      %s41 = sshll.u32 [#allocation5], 4
      %s42 = int_to_ptr.vmem [resolvable:$true] %s41
      %47 = dma.hbm_to_vmem [thread:$0]  %s5, 1024, %s42, [#allocation6], 64, 64, 4
    $region25: #{tpu_custom_call.1} parent=1 // pred_fallthru
      _
    // Predicated region
    $region26: #{tpu_custom_call.1} parent=1 // pred_check
      _
    $region27: #{tpu_custom_call.1} parent=1 // pred_check_branch
      %49 = sbr.rel (0) target = $region29
    $region28: #{tpu_custom_call.1} parent=1 // pred_region
      _
    $region29: #{tpu_custom_call.1} parent=1 // pred_fallthru
      _
    // Predicated region
    $region30: #{tpu_custom_call.1} parent=1 // pred_check
      _
    $region31: #{tpu_custom_call.1} parent=1 // pred_check_branch
      %51 = sbr.rel (0) target = $region33
    $region32: #{tpu_custom_call.1} parent=1 // pred_region
      _
    $region33: #{tpu_custom_call.1} parent=1 // pred_fallthru
      _
    // Predicated region
    $region34: #{tpu_custom_call.1} parent=1 // pred_check
      _
    $region35: #{tpu_custom_call.1} parent=1 // pred_check_branch
      %53 = sbr.rel (0) target = $region37
    $region36: #{tpu_custom_call.1} parent=1 // pred_region
      %54 = dma.done [#allocation3], 4096
    $region37: #{tpu_custom_call.1} parent=1 // pred_fallthru
      _
    // Predicated region
    $region38: #{tpu_custom_call.1} parent=1 // pred_check
      _
    $region39: #{tpu_custom_call.1} parent=1 // pred_check_branch
      %56 = sbr.rel (0) target = $region41
    $region40: #{tpu_custom_call.1} parent=1 // pred_region
      %57 = dma.done [#allocation6], 1024
    $region41: #{tpu_custom_call.1} parent=1 // pred_fallthru
      _
    %v59 = vld [vmem:[%s0] sm:$0xff]
    %v60 = vld [vmem:[%s0 + $0x8] sm:$0xff]
    %v61 = vpack.c.bf16 %v60, %v59
    %v62 = vld [vmem:[%s1] sm:$0xf]
    %v63 = vld [vmem:[%s2] sm:$0x1]
    %v65 = vlaneseq
    %v66 = vshrl.u32 %v65, 7
    %v67 = vsub.s32 0, %v66
    %v68 = vrot.slane %v63, %v67
    %vm70 = vcmask 64512
    %v72 = vsel %vm70, %v61, 0
    %vm74 = vcmask 1043456
    %v76 = vsel %vm74, %v62, 0
    %78 = vmatprep.subr.bf16.mxu0 0
    %79 = vmatpush1.bf16.msra.mxu0 %v76
    %80 = vmatprep.subr.bf16.mxu0 0
    %81 = vmatpush1.bf16.msra.mxu0 0
    %82 = vmatprep.subr.bf16.mxu0 0
    %83 = vmatpush1.bf16.msra.mxu0 0
    %84 = vmatprep.subr.bf16.mxu0 0
    %85 = vmatpush1.bf16.msra.mxu0 0
    %86 = vmatprep.subr.bf16.mxu0 0
    %87 = vmatpush1.bf16.msra.mxu0 0
    %88 = vmatprep.subr.bf16.mxu0 0
    %89 = vmatpush1.bf16.msra.mxu0 0
    %90 = vmatprep.subr.bf16.mxu0 0
    %91 = vmatpush1.bf16.msra.mxu0 0
    %92 = vmatprep.subr.bf16.mxu0 0
    %93 = vmatpush1.bf16.msra.mxu0 0
    %94 = vmatprep.subr.bf16.mxu0 0
    %95 = vmatpush1.bf16.msra.mxu0 0
    %96 = vmatprep.subr.bf16.mxu0 0
    %97 = vmatpush1.bf16.msra.mxu0 0
    %98 = vmatprep.subr.bf16.mxu0 0
    %99 = vmatpush1.bf16.msra.mxu0 0
    %100 = vmatprep.subr.bf16.mxu0 0
    %101 = vmatpush1.bf16.msra.mxu0 0
    %102 = vmatprep.subr.bf16.mxu0 0
    %103 = vmatpush1.bf16.msra.mxu0 0
    %104 = vmatprep.subr.bf16.mxu0 0
    %105 = vmatpush1.bf16.msra.mxu0 0
    %106 = vmatprep.subr.bf16.mxu0 0
    %107 = vmatpush1.bf16.msra.mxu0 0
    %108 = vmatprep.subr.bf16.mxu0 0
    %109 = vmatpush1.bf16.msra.mxu0 0
    %110 = vmatprep.mubr.bf16.mxu0 0
    %111 = vmatmul.mubr.bf16.gmra.mrb[0].mxu0 %v72
    %v112 = vpop.f32.mrb[0].mxu0
    %v113 = vadd.f32 %v68, %v112
    %v114 = vpop.f32.mrb[0].mxu0
    %v115 = vpop.f32.mrb[0].mxu0
    %v116 = vadd.f32 %v68, %v115
    %v117 = vpop.f32.mrb[0].mxu0
    %118 = vdwg.mxu0
    %v119 = vmax.f32 %v113, 0.0
    %v120 = vmax.f32 %v116, 0.0
    %v121 = vpack.c.bf16 %v120, %v119
    %v122 = vld [vmem:[#allocation2] sm:$0xf]
    %v123 = vld [vmem:[#allocation2 + $0x4] sm:$0xf]
    %v124 = vld [vmem:[#allocation2 + $0x8] sm:$0xf]
    %v125 = vld [vmem:[#allocation2 + $0xc] sm:$0xf]
    %v126 = vld [vmem:[#allocation2 + $0x10] sm:$0xf]
    %v127 = vld [vmem:[#allocation2 + $0x14] sm:$0xf]
    %v128 = vld [vmem:[#allocation2 + $0x18] sm:$0xf]
    %v129 = vld [vmem:[#allocation2 + $0x1c] sm:$0xf]
    %v130 = vld [vmem:[#allocation2 + $0x20] sm:$0xf]
    %v131 = vld [vmem:[#allocation2 + $0x24] sm:$0xf]
    %v132 = vld [vmem:[#allocation2 + $0x28] sm:$0xf]
    %v133 = vld [vmem:[#allocation2 + $0x2c] sm:$0xf]
    %v134 = vld [vmem:[#allocation2 + $0x30] sm:$0xf]
    %v135 = vld [vmem:[#allocation2 + $0x34] sm:$0xf]
    %v136 = vld [vmem:[#allocation2 + $0x38] sm:$0xf]
    %v137 = vld [vmem:[#allocation2 + $0x3c] sm:$0xf]
    %v138 = vld [vmem:[%s4] sm:$0x1]
    %v140 = vlaneseq
    %v141 = vshrl.u32 %v140, 7
    %v142 = vsub.s32 0, %v141
    %v143 = vrot.slane %v138, %v142
    %v161 = vunpack.c.l.b16 %v122
    %v162 = vunpack.c.l.b16 %v123
    %v163 = vunpack.c.l.b16 %v124
    %v164 = vunpack.c.l.b16 %v125
    %v165 = vunpack.c.l.b16 %v126
    %v166 = vunpack.c.l.b16 %v127
    %v167 = vunpack.c.l.b16 %v128
    %v168 = vunpack.c.l.b16 %v129
    %v169 = vunpack.c.l.b16 %v130
    %v170 = vunpack.c.l.b16 %v131
    %v171 = vunpack.c.l.b16 %v132
    %v172 = vunpack.c.l.b16 %v133
    %v173 = vunpack.c.l.b16 %v134
    %v174 = vunpack.c.l.b16 %v135
    %v175 = vunpack.c.l.b16 %v136
    %v176 = vunpack.c.l.b16 %v137
    %v177 = vpack.c.b16 %v162, %v161
    %v178 = vpack.c.b16 %v164, %v163
    %v179 = vpack.c.b16 %v166, %v165
    %v180 = vpack.c.b16 %v168, %v167
    %v181 = vpack.c.b16 %v170, %v169
    %v182 = vpack.c.b16 %v172, %v171
    %v183 = vpack.c.b16 %v174, %v173
    %v184 = vpack.c.b16 %v176, %v175
    %193 = vmatprep.subr.bf16.mxu0 0
    %194 = vmatpush1.bf16.msra.mxu0 %v177
    %195 = vmatprep.subr.bf16.mxu0 0
    %196 = vmatpush1.bf16.msra.mxu0 %v178
    %197 = vmatprep.subr.bf16.mxu0 0
    %198 = vmatpush1.bf16.msra.mxu0 %v179
    %199 = vmatprep.subr.bf16.mxu0 0
    %200 = vmatpush1.bf16.msra.mxu0 %v180
    %201 = vmatprep.subr.bf16.mxu0 0
    %202 = vmatpush1.bf16.msra.mxu0 %v181
    %203 = vmatprep.subr.bf16.mxu0 0
    %204 = vmatpush1.bf16.msra.mxu0 %v182
    %205 = vmatprep.subr.bf16.mxu0 0
    %206 = vmatpush1.bf16.msra.mxu0 %v183
    %207 = vmatprep.subr.bf16.mxu0 0
    %208 = vmatpush1.bf16.msra.mxu0 %v184
    %209 = vmatprep.subr.bf16.mxu0 0
    %210 = vmatpush1.bf16.msra.mxu0 0
    %211 = vmatprep.subr.bf16.mxu0 0
    %212 = vmatpush1.bf16.msra.mxu0 0
    %213 = vmatprep.subr.bf16.mxu0 0
    %214 = vmatpush1.bf16.msra.mxu0 0
    %215 = vmatprep.subr.bf16.mxu0 0
    %216 = vmatpush1.bf16.msra.mxu0 0
    %217 = vmatprep.subr.bf16.mxu0 0
    %218 = vmatpush1.bf16.msra.mxu0 0
    %219 = vmatprep.subr.bf16.mxu0 0
    %220 = vmatpush1.bf16.msra.mxu0 0
    %221 = vmatprep.subr.bf16.mxu0 0
    %222 = vmatpush1.bf16.msra.mxu0 0
    %223 = vmatprep.subr.bf16.mxu0 0
    %224 = vmatpush1.bf16.msra.mxu0 0
    %225 = vmatprep.mubr.bf16.mxu0 0
    %226 = vmatmul.mubr.bf16.gmra.mrb[0].mxu0 %v121
    %v227 = vpop.f32.mrb[0].mxu0
    %v228 = vadd.f32 %v143, %v227
    %v229 = vpop.f32.mrb[0].mxu0
    %v230 = vpop.f32.mrb[0].mxu0
    %v231 = vadd.f32 %v143, %v230
    %v232 = vpop.f32.mrb[0].mxu0
    %233 = vdwg.mxu0
    %v234 = vmax.f32 %v228, 0.0
    %v235 = vmax.f32 %v231, 0.0
    %v236 = vpack.c.bf16 %v235, %v234
    %s237 = scalar_lea.vmem [#allocation2], 64
    %v238 = vld [vmem:[%s237] sm:$0xf]
    %v239 = vld [vmem:[%s237 + $0x4] sm:$0xf]
    %v240 = vld [vmem:[%s237 + $0x8] sm:$0xf]
    %v241 = vld [vmem:[%s237 + $0xc] sm:$0xf]
    %v242 = vld [vmem:[%s237 + $0x10] sm:$0xf]
    %v243 = vld [vmem:[%s237 + $0x14] sm:$0xf]
    %v244 = vld [vmem:[%s237 + $0x18] sm:$0xf]
    %v245 = vld [vmem:[%s237 + $0x1c] sm:$0xf]
    %v246 = vld [vmem:[%s237 + $0x20] sm:$0xf]
    %v247 = vld [vmem:[%s237 + $0x24] sm:$0xf]
    %v248 = vld [vmem:[%s237 + $0x28] sm:$0xf]
    %v249 = vld [vmem:[%s237 + $0x2c] sm:$0xf]
    %v250 = vld [vmem:[%s237 + $0x30] sm:$0xf]
    %v251 = vld [vmem:[%s237 + $0x34] sm:$0xf]
    %v252 = vld [vmem:[%s237 + $0x38] sm:$0xf]
    %v253 = vld [vmem:[%s237 + $0x3c] sm:$0xf]
    %s254 = scalar_lea.vmem %s4, 1
    %v255 = vld [vmem:[%s254] sm:$0x1]
    %v257 = vlaneseq
    %v258 = vshrl.u32 %v257, 7
    %v259 = vsub.s32 0, %v258
    %v260 = vrot.slane %v255, %v259
    %v278 = vunpack.c.l.b16 %v238
    %v279 = vunpack.c.l.b16 %v239
    %v280 = vunpack.c.l.b16 %v240
    %v281 = vunpack.c.l.b16 %v241
    %v282 = vunpack.c.l.b16 %v242
    %v283 = vunpack.c.l.b16 %v243
    %v284 = vunpack.c.l.b16 %v244
    %v285 = vunpack.c.l.b16 %v245
    %v286 = vunpack.c.l.b16 %v246
    %v287 = vunpack.c.l.b16 %v247
    %v288 = vunpack.c.l.b16 %v248
    %v289 = vunpack.c.l.b16 %v249
    %v290 = vunpack.c.l.b16 %v250
    %v291 = vunpack.c.l.b16 %v251
    %v292 = vunpack.c.l.b16 %v252
    %v293 = vunpack.c.l.b16 %v253
    %v294 = vpack.c.b16 %v279, %v278
    %v295 = vpack.c.b16 %v281, %v280
    %v296 = vpack.c.b16 %v283, %v282
    %v297 = vpack.c.b16 %v285, %v284
    %v298 = vpack.c.b16 %v287, %v286
    %v299 = vpack.c.b16 %v289, %v288
    %v300 = vpack.c.b16 %v291, %v290
    %v301 = vpack.c.b16 %v293, %v292
    %310 = vmatprep.subr.bf16.mxu0 0
    %311 = vmatpush1.bf16.msra.mxu0 %v294
    %312 = vmatprep.subr.bf16.mxu0 0
    %313 = vmatpush1.bf16.msra.mxu0 %v295
    %314 = vmatprep.subr.bf16.mxu0 0
    %315 = vmatpush1.bf16.msra.mxu0 %v296
    %316 = vmatprep.subr.bf16.mxu0 0
    %317 = vmatpush1.bf16.msra.mxu0 %v297
    %318 = vmatprep.subr.bf16.mxu0 0
    %319 = vmatpush1.bf16.msra.mxu0 %v298
    %320 = vmatprep.subr.bf16.mxu0 0
    %321 = vmatpush1.bf16.msra.mxu0 %v299
    %322 = vmatprep.subr.bf16.mxu0 0
    %323 = vmatpush1.bf16.msra.mxu0 %v300
    %324 = vmatprep.subr.bf16.mxu0 0
    %325 = vmatpush1.bf16.msra.mxu0 %v301
    %326 = vmatprep.subr.bf16.mxu0 0
    %327 = vmatpush1.bf16.msra.mxu0 0
    %328 = vmatprep.subr.bf16.mxu0 0
    %329 = vmatpush1.bf16.msra.mxu0 0
    %330 = vmatprep.subr.bf16.mxu0 0
    %331 = vmatpush1.bf16.msra.mxu0 0
    %332 = vmatprep.subr.bf16.mxu0 0
    %333 = vmatpush1.bf16.msra.mxu0 0
    %334 = vmatprep.subr.bf16.mxu0 0
    %335 = vmatpush1.bf16.msra.mxu0 0
    %336 = vmatprep.subr.bf16.mxu0 0
    %337 = vmatpush1.bf16.msra.mxu0 0
    %338 = vmatprep.subr.bf16.mxu0 0
    %339 = vmatpush1.bf16.msra.mxu0 0
    %340 = vmatprep.subr.bf16.mxu0 0
    %341 = vmatpush1.bf16.msra.mxu0 0
    %342 = vmatprep.mubr.bf16.mxu0 0
    %343 = vmatmul.mubr.bf16.gmra.mrb[0].mxu0 %v236
    %v344 = vpop.f32.mrb[0].mxu0
    %v345 = vadd.f32 %v260, %v344
    %v346 = vpop.f32.mrb[0].mxu0
    %v347 = vpop.f32.mrb[0].mxu0
    %v348 = vadd.f32 %v260, %v347
    %v349 = vpop.f32.mrb[0].mxu0
    %350 = vdwg.mxu0
    %v351 = vadd.f32 %v113, %v345
    %v352 = vadd.f32 %v116, %v348
    %v353 = vmax.f32 %v351, 0.0
    %v354 = vmax.f32 %v352, 0.0
    %v355 = vpack.c.bf16 %v354, %v353
    %s356 = scalar_lea.vmem [#allocation2], 128
    %v357 = vld [vmem:[%s356] sm:$0xf]
    %v358 = vld [vmem:[%s356 + $0x4] sm:$0xf]
    %v359 = vld [vmem:[%s356 + $0x8] sm:$0xf]
    %v360 = vld [vmem:[%s356 + $0xc] sm:$0xf]
    %v361 = vld [vmem:[%s356 + $0x10] sm:$0xf]
    %v362 = vld [vmem:[%s356 + $0x14] sm:$0xf]
    %v363 = vld [vmem:[%s356 + $0x18] sm:$0xf]
    %v364 = vld [vmem:[%s356 + $0x1c] sm:$0xf]
    %v365 = vld [vmem:[%s356 + $0x20] sm:$0xf]
    %v366 = vld [vmem:[%s356 + $0x24] sm:$0xf]
    %v367 = vld [vmem:[%s356 + $0x28] sm:$0xf]
    %v368 = vld [vmem:[%s356 + $0x2c] sm:$0xf]
    %v369 = vld [vmem:[%s356 + $0x30] sm:$0xf]
    %v370 = vld [vmem:[%s356 + $0x34] sm:$0xf]
    %v371 = vld [vmem:[%s356 + $0x38] sm:$0xf]
    %v372 = vld [vmem:[%s356 + $0x3c] sm:$0xf]
    %s373 = scalar_lea.vmem %s4, 2
    %v374 = vld [vmem:[%s373] sm:$0x1]
    %v376 = vlaneseq
    %v377 = vshrl.u32 %v376, 7
    %v378 = vsub.s32 0, %v377
    %v379 = vrot.slane %v374, %v378
    %v397 = vunpack.c.l.b16 %v357
    %v398 = vunpack.c.l.b16 %v358
    %v399 = vunpack.c.l.b16 %v359
    %v400 = vunpack.c.l.b16 %v360
    %v401 = vunpack.c.l.b16 %v361
    %v402 = vunpack.c.l.b16 %v362
    %v403 = vunpack.c.l.b16 %v363
    %v404 = vunpack.c.l.b16 %v364
    %v405 = vunpack.c.l.b16 %v365
    %v406 = vunpack.c.l.b16 %v366
    %v407 = vunpack.c.l.b16 %v367
    %v408 = vunpack.c.l.b16 %v368
    %v409 = vunpack.c.l.b16 %v369
    %v410 = vunpack.c.l.b16 %v370
    %v411 = vunpack.c.l.b16 %v371
    %v412 = vunpack.c.l.b16 %v372
    %v413 = vpack.c.b16 %v398, %v397
    %v414 = vpack.c.b16 %v400, %v399
    %v415 = vpack.c.b16 %v402, %v401
    %v416 = vpack.c.b16 %v404, %v403
    %v417 = vpack.c.b16 %v406, %v405
    %v418 = vpack.c.b16 %v408, %v407
    %v419 = vpack.c.b16 %v410, %v409
    %v420 = vpack.c.b16 %v412, %v411
    %429 = vmatprep.subr.bf16.mxu0 0
    %430 = vmatpush1.bf16.msra.mxu0 %v413
    %431 = vmatprep.subr.bf16.mxu0 0
    %432 = vmatpush1.bf16.msra.mxu0 %v414
    %433 = vmatprep.subr.bf16.mxu0 0
    %434 = vmatpush1.bf16.msra.mxu0 %v415
    %435 = vmatprep.subr.bf16.mxu0 0
    %436 = vmatpush1.bf16.msra.mxu0 %v416
    %437 = vmatprep.subr.bf16.mxu0 0
    %438 = vmatpush1.bf16.msra.mxu0 %v417
    %439 = vmatprep.subr.bf16.mxu0 0
    %440 = vmatpush1.bf16.msra.mxu0 %v418
    %441 = vmatprep.subr.bf16.mxu0 0
    %442 = vmatpush1.bf16.msra.mxu0 %v419
    %443 = vmatprep.subr.bf16.mxu0 0
    %444 = vmatpush1.bf16.msra.mxu0 %v420
    %445 = vmatprep.subr.bf16.mxu0 0
    %446 = vmatpush1.bf16.msra.mxu0 0
    %447 = vmatprep.subr.bf16.mxu0 0
    %448 = vmatpush1.bf16.msra.mxu0 0
    %449 = vmatprep.subr.bf16.mxu0 0
    %450 = vmatpush1.bf16.msra.mxu0 0
    %451 = vmatprep.subr.bf16.mxu0 0
    %452 = vmatpush1.bf16.msra.mxu0 0
    %453 = vmatprep.subr.bf16.mxu0 0
    %454 = vmatpush1.bf16.msra.mxu0 0
    %455 = vmatprep.subr.bf16.mxu0 0
    %456 = vmatpush1.bf16.msra.mxu0 0
    %457 = vmatprep.subr.bf16.mxu0 0
    %458 = vmatpush1.bf16.msra.mxu0 0
    %459 = vmatprep.subr.bf16.mxu0 0
    %460 = vmatpush1.bf16.msra.mxu0 0
    %461 = vmatprep.mubr.bf16.mxu0 0
    %462 = vmatmul.mubr.bf16.gmra.mrb[0].mxu0 %v355
    %v463 = vpop.f32.mrb[0].mxu0
    %v464 = vadd.f32 %v379, %v463
    %v465 = vpop.f32.mrb[0].mxu0
    %v466 = vpop.f32.mrb[0].mxu0
    %v467 = vadd.f32 %v379, %v466
    %v468 = vpop.f32.mrb[0].mxu0
    %469 = vdwg.mxu0
    %v470 = vmax.f32 %v464, 0.0
    %v471 = vmax.f32 %v467, 0.0
    %v472 = vpack.c.bf16 %v471, %v470
    %s473 = scalar_lea.vmem [#allocation2], 192
    %v474 = vld [vmem:[%s473] sm:$0xf]
    %v475 = vld [vmem:[%s473 + $0x4] sm:$0xf]
    %v476 = vld [vmem:[%s473 + $0x8] sm:$0xf]
    %v477 = vld [vmem:[%s473 + $0xc] sm:$0xf]
    %v478 = vld [vmem:[%s473 + $0x10] sm:$0xf]
    %v479 = vld [vmem:[%s473 + $0x14] sm:$0xf]
    %v480 = vld [vmem:[%s473 + $0x18] sm:$0xf]
    %v481 = vld [vmem:[%s473 + $0x1c] sm:$0xf]
    %v482 = vld [vmem:[%s473 + $0x20] sm:$0xf]
    %v483 = vld [vmem:[%s473 + $0x24] sm:$0xf]
    %v484 = vld [vmem:[%s473 + $0x28] sm:$0xf]
    %v485 = vld [vmem:[%s473 + $0x2c] sm:$0xf]
    %v486 = vld [vmem:[%s473 + $0x30] sm:$0xf]
    %v487 = vld [vmem:[%s473 + $0x34] sm:$0xf]
    %v488 = vld [vmem:[%s473 + $0x38] sm:$0xf]
    %v489 = vld [vmem:[%s473 + $0x3c] sm:$0xf]
    %s490 = scalar_lea.vmem %s4, 3
    %v491 = vld [vmem:[%s490] sm:$0x1]
    %v493 = vlaneseq
    %v494 = vshrl.u32 %v493, 7
    %v495 = vsub.s32 0, %v494
    %v496 = vrot.slane %v491, %v495
    %v514 = vunpack.c.l.b16 %v474
    %v515 = vunpack.c.l.b16 %v475
    %v516 = vunpack.c.l.b16 %v476
    %v517 = vunpack.c.l.b16 %v477
    %v518 = vunpack.c.l.b16 %v478
    %v519 = vunpack.c.l.b16 %v479
    %v520 = vunpack.c.l.b16 %v480
    %v521 = vunpack.c.l.b16 %v481
    %v522 = vunpack.c.l.b16 %v482
    %v523 = vunpack.c.l.b16 %v483
    %v524 = vunpack.c.l.b16 %v484
    %v525 = vunpack.c.l.b16 %v485
    %v526 = vunpack.c.l.b16 %v486
    %v527 = vunpack.c.l.b16 %v487
    %v528 = vunpack.c.l.b16 %v488
    %v529 = vunpack.c.l.b16 %v489
    %v530 = vpack.c.b16 %v515, %v514
    %v531 = vpack.c.b16 %v517, %v516
    %v532 = vpack.c.b16 %v519, %v518
    %v533 = vpack.c.b16 %v521, %v520
    %v534 = vpack.c.b16 %v523, %v522
    %v535 = vpack.c.b16 %v525, %v524
    %v536 = vpack.c.b16 %v527, %v526
    %v537 = vpack.c.b16 %v529, %v528
    %546 = vmatprep.subr.bf16.mxu0 0
    %547 = vmatpush1.bf16.msra.mxu0 %v530
    %548 = vmatprep.subr.bf16.mxu0 0
    %549 = vmatpush1.bf16.msra.mxu0 %v531
    %550 = vmatprep.subr.bf16.mxu0 0
    %551 = vmatpush1.bf16.msra.mxu0 %v532
    %552 = vmatprep.subr.bf16.mxu0 0
    %553 = vmatpush1.bf16.msra.mxu0 %v533
    %554 = vmatprep.subr.bf16.mxu0 0
    %555 = vmatpush1.bf16.msra.mxu0 %v534
    %556 = vmatprep.subr.bf16.mxu0 0
    %557 = vmatpush1.bf16.msra.mxu0 %v535
    %558 = vmatprep.subr.bf16.mxu0 0
    %559 = vmatpush1.bf16.msra.mxu0 %v536
    %560 = vmatprep.subr.bf16.mxu0 0
    %561 = vmatpush1.bf16.msra.mxu0 %v537
    %562 = vmatprep.subr.bf16.mxu0 0
    %563 = vmatpush1.bf16.msra.mxu0 0
    %564 = vmatprep.subr.bf16.mxu0 0
    %565 = vmatpush1.bf16.msra.mxu0 0
    %566 = vmatprep.subr.bf16.mxu0 0
    %567 = vmatpush1.bf16.msra.mxu0 0
    %568 = vmatprep.subr.bf16.mxu0 0
    %569 = vmatpush1.bf16.msra.mxu0 0
    %570 = vmatprep.subr.bf16.mxu0 0
    %571 = vmatpush1.bf16.msra.mxu0 0
    %572 = vmatprep.subr.bf16.mxu0 0
    %573 = vmatpush1.bf16.msra.mxu0 0
    %574 = vmatprep.subr.bf16.mxu0 0
    %575 = vmatpush1.bf16.msra.mxu0 0
    %576 = vmatprep.subr.bf16.mxu0 0
    %577 = vmatpush1.bf16.msra.mxu0 0
    %578 = vmatprep.mubr.bf16.mxu0 0
    %579 = vmatmul.mubr.bf16.gmra.mrb[0].mxu0 %v472
    %v580 = vpop.f32.mrb[0].mxu0
    %v581 = vadd.f32 %v496, %v580
    %v582 = vpop.f32.mrb[0].mxu0
    %v583 = vpop.f32.mrb[0].mxu0
    %v584 = vadd.f32 %v496, %v583
    %v585 = vpop.f32.mrb[0].mxu0
    %586 = vdwg.mxu0
    %v587 = vadd.f32 %v351, %v581
    %v588 = vadd.f32 %v352, %v584
    %v589 = vpack.c.bf16 %v588, %v587
    %v590 = vld [vmem:[#allocation5] sm:$0xf]
    %v591 = vld [vmem:[#allocation5 + $0x4] sm:$0xf]
    %v592 = vld [vmem:[#allocation5 + $0x8] sm:$0xf]
    %v593 = vld [vmem:[#allocation5 + $0xc] sm:$0xf]
    %v594 = vld [vmem:[#allocation5 + $0x10] sm:$0xf]
    %v595 = vld [vmem:[#allocation5 + $0x14] sm:$0xf]
    %v596 = vld [vmem:[#allocation5 + $0x18] sm:$0xf]
    %v597 = vld [vmem:[#allocation5 + $0x1c] sm:$0xf]
    %v598 = vld [vmem:[#allocation5 + $0x20] sm:$0xf]
    %v599 = vld [vmem:[#allocation5 + $0x24] sm:$0xf]
    %v600 = vld [vmem:[#allocation5 + $0x28] sm:$0xf]
    %v601 = vld [vmem:[#allocation5 + $0x2c] sm:$0xf]
    %v602 = vld [vmem:[#allocation5 + $0x30] sm:$0xf]
    %v603 = vld [vmem:[#allocation5 + $0x34] sm:$0xf]
    %v604 = vld [vmem:[#allocation5 + $0x38] sm:$0xf]
    %v605 = vld [vmem:[#allocation5 + $0x3c] sm:$0xf]
    %v606 = vld [vmem:[%s6] sm:$0x1]
    %v608 = vlaneseq
    %v609 = vshrl.u32 %v608, 7
    %v610 = vsub.s32 0, %v609
    %v611 = vrot.slane %v606, %v610
    %v629 = vunpack.c.l.b16 %v590
    %v630 = vunpack.c.l.b16 %v591
    %v631 = vunpack.c.l.b16 %v592
    %v632 = vunpack.c.l.b16 %v593
    %v633 = vunpack.c.l.b16 %v594
    %v634 = vunpack.c.l.b16 %v595
    %v635 = vunpack.c.l.b16 %v596
    %v636 = vunpack.c.l.b16 %v597
    %v637 = vunpack.c.l.b16 %v598
    %v638 = vunpack.c.l.b16 %v599
    %v639 = vunpack.c.l.b16 %v600
    %v640 = vunpack.c.l.b16 %v601
    %v641 = vunpack.c.l.b16 %v602
    %v642 = vunpack.c.l.b16 %v603
    %v643 = vunpack.c.l.b16 %v604
    %v644 = vunpack.c.l.b16 %v605
    %v645 = vpack.c.b16 %v630, %v629
    %v646 = vpack.c.b16 %v632, %v631
    %v647 = vpack.c.b16 %v634, %v633
    %v648 = vpack.c.b16 %v636, %v635
    %v649 = vpack.c.b16 %v638, %v637
    %v650 = vpack.c.b16 %v640, %v639
    %v651 = vpack.c.b16 %v642, %v641
    %v652 = vpack.c.b16 %v644, %v643
    %661 = vmatprep.subr.bf16.mxu0 0
    %662 = vmatpush1.bf16.msra.mxu0 %v645
    %663 = vmatprep.subr.bf16.mxu0 0
    %664 = vmatpush1.bf16.msra.mxu0 %v646
    %665 = vmatprep.subr.bf16.mxu0 0
    %666 = vmatpush1.bf16.msra.mxu0 %v647
    %667 = vmatprep.subr.bf16.mxu0 0
    %668 = vmatpush1.bf16.msra.mxu0 %v648
    %669 = vmatprep.subr.bf16.mxu0 0
    %670 = vmatpush1.bf16.msra.mxu0 %v649
    %671 = vmatprep.subr.bf16.mxu0 0
    %672 = vmatpush1.bf16.msra.mxu0 %v650
    %673 = vmatprep.subr.bf16.mxu0 0
    %674 = vmatpush1.bf16.msra.mxu0 %v651
    %675 = vmatprep.subr.bf16.mxu0 0
    %676 = vmatpush1.bf16.msra.mxu0 %v652
    %677 = vmatprep.subr.bf16.mxu0 0
    %678 = vmatpush1.bf16.msra.mxu0 0
    %679 = vmatprep.subr.bf16.mxu0 0
    %680 = vmatpush1.bf16.msra.mxu0 0
    %681 = vmatprep.subr.bf16.mxu0 0
    %682 = vmatpush1.bf16.msra.mxu0 0
    %683 = vmatprep.subr.bf16.mxu0 0
    %684 = vmatpush1.bf16.msra.mxu0 0
    %685 = vmatprep.subr.bf16.mxu0 0
    %686 = vmatpush1.bf16.msra.mxu0 0
    %687 = vmatprep.subr.bf16.mxu0 0
    %688 = vmatpush1.bf16.msra.mxu0 0
    %689 = vmatprep.subr.bf16.mxu0 0
    %690 = vmatpush1.bf16.msra.mxu0 0
    %691 = vmatprep.subr.bf16.mxu0 0
    %692 = vmatpush1.bf16.msra.mxu0 0
    %693 = vmatprep.mubr.bf16.mxu0 0
    %694 = vmatmul.mubr.bf16.gmra.mrb[0].mxu0 %v589
    %v695 = vpop.f32.mrb[0].mxu0
    %v696 = vadd.f32 %v611, %v695
    %v697 = vpop.f32.mrb[0].mxu0
    %v698 = vpop.f32.mrb[0].mxu0
    %v699 = vadd.f32 %v611, %v698
    %v700 = vpop.f32.mrb[0].mxu0
    %701 = vdwg.mxu0
    %v702 = vld [vmem:[%s7] sm:$0xff]
    %v703 = vand.u32 2147483647, %v696
    %v704 = vand.u32 2147483647, %v699
    %vm705 = vcmp.ge.f32.partialorder %v696, 0.0
    %vm706 = vcmp.ge.f32.partialorder %v699, 0.0
    %v707 = vsel %vm705, 1.0, -1.0
    %v708 = vsel %vm706, 1.0, -1.0
    %v709 = vlaneseq
    %v710 = vshrl.u32 %v709, 7
    %v711 = vsub.s32 0, %v710
    %v712 = vrot.slane %v702, %v711
    %v713 = vmul.f32 %v712, %v696
    %v714 = vmul.f32 %v712, %v699
    %v715 = vmul.f32 %v703, 0.70710677
    %v716 = vmul.f32 %v704, 0.70710677
    %v717 = vmul.f32 %v715, 0.5
    %v718 = vmul.f32 %v716, 0.5
    %v719 = vadd.f32 %v717, 1.0
    %v720 = vadd.f32 %v718, 1.0
    %v721 = vrcp.pop %v719
    %v722 = vrcp.pop %v720
    %v723 = vmul.f32 %v721, 0.17087276
    %v724 = vmul.f32 %v722, 0.17087276
    %v725 = vadd.f32 %v723, -0.82215226
    %v726 = vadd.f32 %v724, -0.82215226
    %v727 = vmul.f32 %v721, %v725
    %v728 = vmul.f32 %v722, %v726
    %v729 = vadd.f32 %v727, 1.4885159
    %v730 = vadd.f32 %v728, 1.4885159
    %v731 = vmul.f32 %v721, %v729
    %v732 = vmul.f32 %v722, %v730
    %v733 = vadd.f32 %v731, -1.135204
    %v734 = vadd.f32 %v732, -1.135204
    %v735 = vmul.f32 %v721, %v733
    %v736 = vmul.f32 %v722, %v734
    %v737 = vadd.f32 %v735, 0.27886808
    %v738 = vadd.f32 %v736, 0.27886808
    %v739 = vmul.f32 %v721, %v737
    %v740 = vmul.f32 %v722, %v738
    %v741 = vadd.f32 %v739, -0.18628806
    %v742 = vadd.f32 %v740, -0.18628806
    %v743 = vmul.f32 %v721, %v741
    %v744 = vmul.f32 %v722, %v742
    %v745 = vadd.f32 %v743, 0.09678418
    %v746 = vadd.f32 %v744, 0.09678418
    %v747 = vmul.f32 %v721, %v745
    %v748 = vmul.f32 %v722, %v746
    %v749 = vadd.f32 %v747, 0.37409195
    %v750 = vadd.f32 %v748, 0.37409195
    %v751 = vmul.f32 %v721, %v749
    %v752 = vmul.f32 %v722, %v750
    %v753 = vadd.f32 %v751, 1.0000237
    %v754 = vadd.f32 %v752, 1.0000237
    %v755 = vmul.f32 %v721, %v753
    %v756 = vmul.f32 %v722, %v754
    %v757 = vadd.f32 %v755, -1.2655122
    %v758 = vadd.f32 %v756, -1.2655122
    %v759 = vlog2.pop %v721
    %v760 = vmul.f32 %v759, 0.6931472
    %v761 = vlog2.pop %v722
    %v762 = vmul.f32 %v761, 0.6931472
    %v763 = vmul.f32 %v715, %v715
    %v764 = vmul.f32 %v716, %v716
    %v765 = vsub.f32 %v757, %v763
    %v766 = vsub.f32 %v758, %v764
    %v767 = vadd.f32 %v760, %v765
    %v768 = vadd.f32 %v762, %v766
    %v769 = vsub.f32 0.0, %v702
    %v770 = vlaneseq
    %v771 = vshrl.u32 %v770, 7
    %v772 = vsub.s32 3, %v771
    %v773 = vrot.slane %v769, %v772
    %v774 = vmul.f32 %v773, %v767
    %v775 = vmul.f32 %v773, %v768
    %v776 = vmul.f32 %v774, 1.442695
    %v777 = vpow.pop %v776
    %v778 = vmul.f32 %v775, 1.442695
    %v779 = vpow.pop %v778
    %v780 = vsub.f32 %v777, 1.0
    %v781 = vsub.f32 %v779, 1.0
    %v782 = vlaneseq
    %v783 = vshrl.u32 %v782, 7
    %v784 = vsub.s32 4, %v783
    %v785 = vrot.slane %v702, %v784
    %v786 = vmul.f32 %v780, %v785
    %v787 = vmul.f32 %v781, %v785
    %v788 = vmul.f32 %v786, %v707
    %v789 = vmul.f32 %v787, %v708
    %v790 = vlaneseq
    %v791 = vshrl.u32 %v790, 7
    %v792 = vsub.s32 1, %v791
    %v793 = vrot.slane %v702, %v792
    %v794 = vmul.f32 %v793, %v788
    %v795 = vmul.f32 %v793, %v789
    %v796 = vadd.f32 %v713, %v794
    %v797 = vadd.f32 %v714, %v795
    %v798 = vlaneseq
    %v799 = vshrl.u32 %v798, 7
    %v800 = vsub.s32 5, %v799
    %v801 = vrot.slane %v702, %v800
    %v802 = vmul.f32 %v801, %v703
    %v803 = vmul.f32 %v801, %v704
    %v804 = vadd.f32 %v802, 1.0
    %v805 = vadd.f32 %v803, 1.0
    %v806 = vlog2.pop %v804
    %v807 = vmul.f32 %v806, 0.6931472
    %v808 = vlog2.pop %v805
    %v809 = vmul.f32 %v808, 0.6931472
    %v810 = vlaneseq
    %v811 = vshrl.u32 %v810, 7
    %v812 = vsub.s32 6, %v811
    %v813 = vrot.slane %v702, %v812
    %v814 = vmul.f32 %v813, %v807
    %v815 = vmul.f32 %v813, %v809
    %v816 = vmul.f32 %v814, 1.442695
    %v817 = vpow.pop %v816
    %v818 = vmul.f32 %v815, 1.442695
    %v819 = vpow.pop %v818
    %v820 = vmax.f32 %v817, 1e-06
    %v821 = vmax.f32 %v819, 1e-06
    %v822 = vsub.f32 1.0, %v820
    %v823 = vsub.f32 1.0, %v821
    %v824 = vsub.f32 1.0, %v822
    %v825 = vsub.f32 1.0, %v823
    %v826 = vadd.f32 %v822, 1.0
    %v827 = vadd.f32 %v823, 1.0
    %v828 = vmul.f32 %v824, %v826
    %v829 = vmul.f32 %v825, %v827
    %v830 = vlog2.pop %v828
    %v831 = vmul.f32 %v830, 0.6931472
    %v832 = vlog2.pop %v829
    %v833 = vmul.f32 %v832, 0.6931472
    %v834 = vsub.f32 0.0, %v831
    %v835 = vsub.f32 0.0, %v833
    %v836 = vsub.f32 %v834, 2.5
    %v837 = vsub.f32 %v835, 2.5
    %v838 = vmul.f32 %v836, 2.8102264e-08
    %v839 = vmul.f32 %v837, 2.8102264e-08
    %v840 = vadd.f32 %v838, 3.4327394e-07
    %v841 = vadd.f32 %v839, 3.4327394e-07
    %v842 = vmul.f32 %v840, %v836
    %v843 = vmul.f32 %v841, %v837
    %v844 = vadd.f32 %v842, -3.5233877e-06
    %v845 = vadd.f32 %v843, -3.5233877e-06
    %v846 = vmul.f32 %v844, %v836
    %v847 = vmul.f32 %v845, %v837
    %v848 = vadd.f32 %v846, -4.3915065e-06
    %v849 = vadd.f32 %v847, -4.3915065e-06
    %v850 = vmul.f32 %v848, %v836
    %v851 = vmul.f32 %v849, %v837
    %v852 = vadd.f32 %v850, 0.00021858087
    %v853 = vadd.f32 %v851, 0.00021858087
    %v854 = vmul.f32 %v852, %v836
    %v855 = vmul.f32 %v853, %v837
    %v856 = vadd.f32 %v854, -0.001253725
    %v857 = vadd.f32 %v855, -0.001253725
    %v858 = vmul.f32 %v856, %v836
    %v859 = vmul.f32 %v857, %v837
    %v860 = vadd.f32 %v858, -0.0041776816
    %v861 = vadd.f32 %v859, -0.0041776816
    %v862 = vmul.f32 %v860, %v836
    %v863 = vmul.f32 %v861, %v837
    %v864 = vadd.f32 %v862, 0.24664073
    %v865 = vadd.f32 %v863, 0.24664073
    %v866 = vmul.f32 %v864, %v836
    %v867 = vmul.f32 %v865, %v837
    %v868 = vadd.f32 %v866, 1.5014094
    %v869 = vadd.f32 %v867, 1.5014094
    %v870 = vrsqrt.pop %v834
    %v871 = vmul.f32 %v834, %v870
    %vm872 = vcmp.eq.f32.partialorder %v834, inf
    %v873 = vsel %vm872, %v834, %v871
    %vm874 = vcmp.eq.f32.partialorder %v834, 0.0
    %v875 = vand.u32 %v834, 2147483648
    %v876 = vsel %vm874, %v875, %v873
    %v877 = vrsqrt.pop %v835
    %v878 = vmul.f32 %v835, %v877
    %vm879 = vcmp.eq.f32.partialorder %v835, inf
    %v880 = vsel %vm879, %v835, %v878
    %vm881 = vcmp.eq.f32.partialorder %v835, 0.0
    %v882 = vand.u32 %v835, 2147483648
    %v883 = vsel %vm881, %v882, %v880
    %v884 = vsub.f32 %v876, 3.0
    %v885 = vsub.f32 %v883, 3.0
    %v886 = vmul.f32 %v884, -0.00020021426
    %v887 = vmul.f32 %v885, -0.00020021426
    %v888 = vadd.f32 %v886, 0.00010095056
    %v889 = vadd.f32 %v887, 0.00010095056
    %v890 = vmul.f32 %v888, %v884
    %v891 = vmul.f32 %v889, %v885
    %v892 = vadd.f32 %v890, 0.0013493432
    %v893 = vadd.f32 %v891, 0.0013493432
    %v894 = vmul.f32 %v892, %v884
    %v895 = vmul.f32 %v893, %v885
    %v896 = vadd.f32 %v894, -0.0036734284
    %v897 = vadd.f32 %v895, -0.0036734284
    %v898 = vmul.f32 %v896, %v884
    %v899 = vmul.f32 %v897, %v885
    %v900 = vadd.f32 %v898, 0.0057395077
    %v901 = vadd.f32 %v899, 0.0057395077
    %v902 = vmul.f32 %v900, %v884
    %v903 = vmul.f32 %v901, %v885
    %v904 = vadd.f32 %v902, -0.0076224613
    %v905 = vadd.f32 %v903, -0.0076224613
    %v906 = vmul.f32 %v904, %v884
    %v907 = vmul.f32 %v905, %v885
    %v908 = vadd.f32 %v906, 0.0094388705
    %v909 = vadd.f32 %v907, 0.0094388705
    %v910 = vmul.f32 %v908, %v884
    %v911 = vmul.f32 %v909, %v885
    %v912 = vadd.f32 %v910, 1.001674
    %v913 = vadd.f32 %v911, 1.001674
    %v914 = vmul.f32 %v912, %v884
    %v915 = vmul.f32 %v913, %v885
    %v916 = vadd.f32 %v914, 2.8329768
    %v917 = vadd.f32 %v915, 2.8329768
    %vm918 = vcmp.lt.f32.partialorder %v834, 5.0
    %vm919 = vcmp.lt.f32.partialorder %v835, 5.0
    %v920 = vsel %vm918, %v868, %v916
    %v921 = vsel %vm919, %v869, %v917
    %v922 = vmul.f32 %v920, %v822
    %v923 = vmul.f32 %v921, %v823
    %v924 = vlaneseq
    %v925 = vshrl.u32 %v924, 7
    %v926 = vsub.s32 7, %v925
    %v927 = vrot.slane %v702, %v926
    %v928 = vmul.f32 %v927, %v807
    %v929 = vmul.f32 %v927, %v809
    %v930 = vadd.f32 %v928, -0.4515827
    %v931 = vadd.f32 %v929, -0.4515827
    %v932 = vmax.f32 %v930, 1e-30
    %v933 = vmax.f32 %v931, 1e-30
    %v934 = vlog2.pop %v932
    %v935 = vmul.f32 %v934, 0.6931472
    %v936 = vlog2.pop %v933
    %v937 = vmul.f32 %v936, 0.6931472
    %v938 = vsub.f32 %v932, %v935
    %v939 = vsub.f32 %v933, %v937
    %v940 = vrsqrt.pop %v938
    %v941 = vmul.f32 %v938, %v940
    %vm942 = vcmp.eq.f32.partialorder %v938, inf
    %v943 = vsel %vm942, %v938, %v941
    %vm944 = vcmp.eq.f32.partialorder %v938, 0.0
    %v945 = vand.u32 %v938, 2147483648
    %v946 = vsel %vm944, %v945, %v943
    %v947 = vrsqrt.pop %v939
    %v948 = vmul.f32 %v939, %v947
    %vm949 = vcmp.eq.f32.partialorder %v939, inf
    %v950 = vsel %vm949, %v939, %v948
    %vm951 = vcmp.eq.f32.partialorder %v939, 0.0
    %v952 = vand.u32 %v939, 2147483648
    %v953 = vsel %vm951, %v952, %v950
    %v954 = vmul.f32 %v946, 0.70710677
    %v955 = vmul.f32 %v953, 0.70710677
    %vm956 = vcmp.gt.f32.partialorder %v817, 1e-06
    %vm957 = vcmp.gt.f32.partialorder %v819, 1e-06
    %v958 = vsel %vm956, %v922, %v954
    %v959 = vsel %vm957, %v923, %v955
    %v960 = vmul.f32 %v958, 1.4142135
    %v961 = vmul.f32 %v959, 1.4142135
    %v962 = vmul.f32 %v960, %v707
    %v963 = vmul.f32 %v961, %v708
    %v964 = vlaneseq
    %v965 = vshrl.u32 %v964, 7
    %v966 = vsub.s32 2, %v965
    %v967 = vrot.slane %v702, %v966
    %v968 = vmul.f32 %v967, %v962
    %v969 = vmul.f32 %v967, %v963
    %v970 = vadd.f32 %v796, %v968
    %v971 = vadd.f32 %v797, %v969
    %972 = vst [vmem:[#allocation7] sm:$0xff] %v970
    %973 = vst [vmem:[#allocation7 + $0x8] sm:$0xff] %v971
    // Predicated region
    $region42: #{tpu_custom_call.1} parent=1 // pred_check
      _
    $region43: #{tpu_custom_call.1} parent=1 // pred_check_branch
      %975 = sbr.rel (0) target = $region45
    $region44: #{tpu_custom_call.1} parent=1 // pred_region
      %s977 = ssub.s32 256, 256
      %978 = vsyncadd [#allocation4], %s977
      %s979 = sshll.u32 [#allocation7], 4
      %s980 = int_to_ptr.vmem [resolvable:$true] %s979
      %985 = dma.vmem_to_hbm [thread:$0]  %s980, 256, %s8, [#allocation4], 128, 128, 8
    $region45: #{tpu_custom_call.1} parent=1 // pred_fallthru
      _
    // Predicated region
    $region46: #{tpu_custom_call.1} parent=1 // pred_check
      _
    $region47: #{tpu_custom_call.1} parent=1 // pred_check_branch
      %987 = sbr.rel (0) target = $region49
    $region48: #{tpu_custom_call.1} parent=1 // pred_region
      %988 = dma.done [#allocation4], 256
    $region49: #{tpu_custom_call.1} parent=1 // pred_fallthru
      _
    %989 = vsyncpa [#allocation3], 1
    %990 = vsyncpa [#allocation6], 1
    %991 = vsyncpa [#allocation4], 1

</llo_original>
